<compile_context>
chip_gen: v6e
topology: v6e:2x2x1
jax: 0.10.0
libtpu: 0.0.40
codegen_flags: <defaults>
</compile_context>

<pallas_src>
from math import exp

import numpy as np
import jax
import jax.numpy as jnp
from jax.experimental import pallas as pl
from jax.experimental.pallas import tpu as pltpu


def _gaussian_1d(window_size: int, sigma: float = 1.5) -> np.ndarray:
    """Matches torch: gaussian(window_size, 1.5), normalized, float32."""
    g = np.array(
        [exp(-(x - window_size // 2) ** 2 / float(2 * sigma ** 2)) for x in range(window_size)],
        dtype=np.float64,
    )
    g = g / g.sum()
    return g.astype(np.float32)


def _row_toeplitz(width: int, ws: int, g1d: np.ndarray) -> np.ndarray:
    """Banded Toeplitz (W, Wo) so that X @ T_w == 'valid' 1-D conv along W."""
    wo = width - ws + 1
    t = np.zeros((width, wo), dtype=np.float32)
    for j in range(wo):
        t[j:j + ws, j] = g1d
    return t


def _choose_nc_block(nc: int, h: int, w: int) -> int:
    """Largest divisor of nc under a conservative VMEM budget (v7x-safe).

    Rough per-slice bytes: 2 inputs x 2 double-buffers x H*W*4 plus ~15 HxW f32
    temporaries inside the kernel.  Budget ~24 MiB leaves headroom even on
    v7x's 64 MiB VMEM.
    """
    budget = 24 * 1024 * 1024
    per_unit = 76 * h * w
    cap = max(1, budget // per_unit)
    divisors = [d for d in range(1, nc + 1) if nc % d == 0 and d <= cap]
    blk = max(divisors) if divisors else 1
    # Prefer >= 2 grid steps when possible so the DMA pipeline can overlap.
    if blk == nc and nc > 1:
        proper = [d for d in divisors if d < nc]
        if proper:
            blk = max(proper)
    return blk


def _make_ssim_kernel(ws: int, ho: int, wo: int, g_taps, inv_total: float):
    """g_taps: ws python floats (baked 1-D gaussian); inv_total: 1/(NC*ho*wo)."""

    def kernel(cvals_ref, x1_ref, x2_ref, tw_ref, out_ref):
        c1 = cvals_ref[0]
        c2 = cvals_ref[1]

        x1 = x1_ref[...]                      # (nc_blk, H, W) f32
        x2 = x2_ref[...]
        tw = tw_ref[...]                      # (W, Wo) f32 Toeplitz
        nc_blk, h, w = x1.shape

        # Hoisted product maps (computed once, not per tap).
        ops = [x1, x2, x1 * x1, x2 * x2, x1 * x2]

        def row_pass(a):
            # Contract over W on the MXU: (nc_blk*H, W) @ (W, Wo).
            r = jnp.dot(a.reshape(nc_blk * h, w), tw,
                        preferred_element_type=jnp.float32)
            return r.reshape(nc_blk, h, wo)

        def col_pass(r):
            # 11-tap "valid" stencil along H (sublane axis) on the VPU.
            acc = g_taps[0] * r[:, 0:ho, :]
            for i in range(1, ws):
                acc = acc + g_taps[i] * r[:, i:i + ho, :]
            return acc

        mu1, mu2, s11, s22, s12 = [col_pass(row_pass(a)) for a in ops]

        mu1_sq = mu1 * mu1
        mu2_sq = mu2 * mu2
        mu1_mu2 = mu1 * mu2
        sigma1_sq = s11 - mu1_sq
        sigma2_sq = s22 - mu2_sq
        sigma12 = s12 - mu1_mu2

        v1 = 2.0 * sigma12 + c2
        v2 = sigma1_sq + sigma2_sq + c2
        num = (2.0 * mu1_mu2 + c1) * v1
        den = (mu1_sq + mu2_sq + c1) * v2
        ssim_map = num * pl.reciprocal(den, approx=True)

        partial = jnp.sum(ssim_map) * inv_total   # this block's share of the mean

        @pl.when(pl.program_id(0) == 0)
        def _():
            out_ref[...] = jnp.zeros_like(out_ref)

        out_ref[...] = out_ref[...] + partial

    return kernel


def ssim_pallas(img1: jax.Array, img2: jax.Array, window_size: int = 11) -> jax.Array:
    """SSIM.forward(img1, img2) with size_average=True; returns scalar f32."""
    n, c, h, w = img1.shape
    ws = min(window_size, h, w)               # torch: real_size = min(ws, H, W)
    ho, wo = h - ws + 1, w - ws + 1
    assert ho >= 1 and wo >= 1
    nc = n * c

    g1d = _gaussian_1d(ws, 1.5)
    g_taps = [float(v) for v in g1d]
    tw = jnp.asarray(_row_toeplitz(w, ws, g1d))          # (W, Wo)

    x1 = img1.reshape(nc, h, w).astype(jnp.float32)
    x2 = img2.reshape(nc, h, w).astype(jnp.float32)

    # Data-dependent dynamic range L (val_range is None branch) -- computed in
    # the wrapper since a tiled kernel block cannot see the global max/min.
    max_val = jnp.where(jnp.max(x1) > 128.0, 255.0, 1.0)
    min_val = jnp.where(jnp.min(x1) < -0.5, -1.0, 0.0)
    L = (max_val - min_val).astype(jnp.float32)
    cvals = jnp.stack([(0.01 * L) ** 2, (0.03 * L) ** 2]).astype(jnp.float32)

    nc_blk = _choose_nc_block(nc, h, w)
    grid_n = nc // nc_blk
    inv_total = 1.0 / float(nc * ho * wo)

    out = pl.pallas_call(
        _make_ssim_kernel(ws, ho, wo, g_taps, inv_total),
        out_shape=jax.ShapeDtypeStruct((1, 1), jnp.float32),
        grid=(grid_n,),
        in_specs=[
            pl.BlockSpec(memory_space=pltpu.MemorySpace.SMEM),        # C1, C2 scalars
            pl.BlockSpec((nc_blk, h, w), lambda i: (i, 0, 0)),        # x1 tile
            pl.BlockSpec((nc_blk, h, w), lambda i: (i, 0, 0)),        # x2 tile
            pl.BlockSpec((w, wo), lambda i: (0, 0)),                  # Toeplitz weights
        ],
        out_specs=pl.BlockSpec((1, 1), lambda i: (0, 0)),             # resident accumulator
        compiler_params=pltpu.CompilerParams(
            dimension_semantics=("arbitrary",),      # output accumulates across this axis
            vmem_limit_bytes=48 * 1024 * 1024,
        ),
    )(cvals, x1, x2, tw)
    return out[0, 0]


def _ssim_reference(img1, img2, window_size=11):
    """Pure-JAX reference mirroring the torch math (direct 2-D tap loop)."""
    n, c, h, w = img1.shape
    ws = min(window_size, h, w)
    ho, wo = h - ws + 1, w - ws + 1
    g1d = _gaussian_1d(ws, 1.5)
    w2d = jnp.asarray(np.outer(g1d, g1d).astype(np.float32))
    x1 = img1.reshape(n * c, h, w).astype(jnp.float32)
    x2 = img2.reshape(n * c, h, w).astype(jnp.float32)

    def conv(x):
        acc = jnp.zeros((n * c, ho, wo), jnp.float32)
        for i in range(ws):
            for j in range(ws):
                acc = acc + w2d[i, j] * x[:, i:i + ho, j:j + wo]
        return acc

    maxv, minv = jnp.max(x1), jnp.min(x1)
    L = jnp.where(maxv > 128.0, 255.0, 1.0) - jnp.where(minv < -0.5, -1.0, 0.0)
    c1, c2 = (0.01 * L) ** 2, (0.03 * L) ** 2
    mu1, mu2 = conv(x1), conv(x2)
    s11 = conv(x1 * x1) - mu1 * mu1
    s22 = conv(x2 * x2) - mu2 * mu2
    s12 = conv(x1 * x2) - mu1 * mu2
    v1 = 2.0 * s12 + c2
    v2 = s11 + s22 + c2
    ssim_map = (2.0 * mu1 * mu2 + c1) * v1 / ((mu1 * mu1 + mu2 * mu2 + c1) * v2)
    return jnp.mean(ssim_map)


if __name__ == "__main__":
    key = jax.random.PRNGKey(0)
    k1, k2 = jax.random.split(key)
    # batch=2, channels=4, spatial=16x16 (>= window_size=11)
    img1 = jax.random.uniform(k1, (2, 4, 16, 16), dtype=jnp.float32)
    img2 = jax.random.uniform(k2, (2, 4, 16, 16), dtype=jnp.float32)

    out = ssim_pallas(img1, img2, window_size=11)
    out = jax.block_until_ready(out)

    ref = jax.block_until_ready(_ssim_reference(img1, img2, window_size=11))
    assert np.isfinite(float(out)), "non-finite SSIM"
    np.testing.assert_allclose(np.asarray(out), np.asarray(ref), rtol=2e-3, atol=2e-3)

    print("KERNEL_OK")
</pallas_src>

<mosaic_0001>
module attributes {stable_mosaic.version = 11 : i64} {
  func.func @kernel(%arg0: i32, %arg1: memref<2xf32, #tpu.memory_space<smem>>, %arg2: memref<4x16x16xf32, #tpu.memory_space<vmem>>, %arg3: memref<4x16x16xf32, #tpu.memory_space<vmem>>, %arg4: memref<16x6xf32, #tpu.memory_space<vmem>>, %arg5: memref<1x1xf32, #tpu.memory_space<vmem>>) attributes {dimension_semantics = [#tpu.dimension_semantics<arbitrary>], iteration_bounds = array<i64: 2>, scalar_prefetch = 0 : i64, scratch_operands = 0 : i64, tpu.core_type = #tpu.core_type<tc>, window_params = [{transform_indices = @transform_0, window_bounds = array<i64: 2>}, {transform_indices = @transform_1, window_bounds = array<i64: 4, 16, 16>}, {transform_indices = @transform_2, window_bounds = array<i64: 4, 16, 16>}, {pipeline_mode = #tpu.pipeline_mode<synchronous>, transform_indices = @transform_3, window_bounds = array<i64: 16, 6>}, {pipeline_mode = #tpu.pipeline_mode<synchronous>, transform_indices = @transform_4, window_bounds = array<i64: 1, 1>}]} {
    %c0 = arith.constant 0 : index
    %0 = memref.load %arg1[%c0] : memref<2xf32, #tpu.memory_space<smem>>
    %c1 = arith.constant 1 : index
    %1 = memref.load %arg1[%c1] : memref<2xf32, #tpu.memory_space<smem>>
    %c0_0 = arith.constant 0 : index
    %c0_1 = arith.constant 0 : index
    %c0_2 = arith.constant 0 : index
    %2 = vector.load %arg2[%c0_0, %c0_1, %c0_2] : memref<4x16x16xf32, #tpu.memory_space<vmem>>, vector<4x16x16xf32>
    %c0_3 = arith.constant 0 : index
    %c0_4 = arith.constant 0 : index
    %c0_5 = arith.constant 0 : index
    %3 = vector.load %arg3[%c0_3, %c0_4, %c0_5] : memref<4x16x16xf32, #tpu.memory_space<vmem>>, vector<4x16x16xf32>
    %c0_6 = arith.constant 0 : index
    %c0_7 = arith.constant 0 : index
    %4 = vector.load %arg4[%c0_6, %c0_7] : memref<16x6xf32, #tpu.memory_space<vmem>>, vector<16x6xf32>
    %5 = arith.mulf %2, %2 : vector<4x16x16xf32>
    %6 = arith.mulf %3, %3 : vector<4x16x16xf32>
    %7 = arith.mulf %2, %3 : vector<4x16x16xf32>
    %8 = vector.shape_cast %2 : vector<4x16x16xf32> to vector<64x16xf32>
    %cst = arith.constant dense<0.000000e+00> : vector<64x6xf32>
    %9 = tpu.matmul %8, %4, %cst {dimension_numbers = #tpu.dot_dimension_numbers<[1], [0], [0], [1], [0, 0, 1, 1], [], []>} : vector<64x16xf32>, vector<16x6xf32>, vector<64x6xf32> -> vector<64x6xf32>
    %10 = vector.shape_cast %9 : vector<64x6xf32> to vector<4x16x6xf32>
    %11 = vector.extract_strided_slice %10 {offsets = [0, 0, 0], sizes = [4, 6, 6], strides = [1, 1, 1]} : vector<4x16x6xf32> to vector<4x6x6xf32>
    %cst_8 = arith.constant 0.00102838012 : f32
    %12 = vector.broadcast %cst_8 : f32 to vector<4x6x6xf32>
    %13 = arith.mulf %12, %11 : vector<4x6x6xf32>
    %14 = vector.extract_strided_slice %10 {offsets = [0, 1, 0], sizes = [4, 6, 6], strides = [1, 1, 1]} : vector<4x16x6xf32> to vector<4x6x6xf32>
    %cst_9 = arith.constant 0.00759875821 : f32
    %15 = vector.broadcast %cst_9 : f32 to vector<4x6x6xf32>
    %16 = arith.mulf %15, %14 : vector<4x6x6xf32>
    %17 = arith.addf %13, %16 : vector<4x6x6xf32>
    %18 = vector.extract_strided_slice %10 {offsets = [0, 2, 0], sizes = [4, 6, 6], strides = [1, 1, 1]} : vector<4x16x6xf32> to vector<4x6x6xf32>
    %cst_10 = arith.constant 0.0360007733 : f32
    %19 = vector.broadcast %cst_10 : f32 to vector<4x6x6xf32>
    %20 = arith.mulf %19, %18 : vector<4x6x6xf32>
    %21 = arith.addf %17, %20 : vector<4x6x6xf32>
    %22 = vector.extract_strided_slice %10 {offsets = [0, 3, 0], sizes = [4, 6, 6], strides = [1, 1, 1]} : vector<4x16x6xf32> to vector<4x6x6xf32>
    %cst_11 = arith.constant 0.109360687 : f32
    %23 = vector.broadcast %cst_11 : f32 to vector<4x6x6xf32>
    %24 = arith.mulf %23, %22 : vector<4x6x6xf32>
    %25 = arith.addf %21, %24 : vector<4x6x6xf32>
    %26 = vector.extract_strided_slice %10 {offsets = [0, 4, 0], sizes = [4, 6, 6], strides = [1, 1, 1]} : vector<4x16x6xf32> to vector<4x6x6xf32>
    %cst_12 = arith.constant 0.213005543 : f32
    %27 = vector.broadcast %cst_12 : f32 to vector<4x6x6xf32>
    %28 = arith.mulf %27, %26 : vector<4x6x6xf32>
    %29 = arith.addf %25, %28 : vector<4x6x6xf32>
    %30 = vector.extract_strided_slice %10 {offsets = [0, 5, 0], sizes = [4, 6, 6], strides = [1, 1, 1]} : vector<4x16x6xf32> to vector<4x6x6xf32>
    %cst_13 = arith.constant 0.266011715 : f32
    %31 = vector.broadcast %cst_13 : f32 to vector<4x6x6xf32>
    %32 = arith.mulf %31, %30 : vector<4x6x6xf32>
    %33 = arith.addf %29, %32 : vector<4x6x6xf32>
    %34 = vector.extract_strided_slice %10 {offsets = [0, 6, 0], sizes = [4, 6, 6], strides = [1, 1, 1]} : vector<4x16x6xf32> to vector<4x6x6xf32>
    %cst_14 = arith.constant 0.213005543 : f32
    %35 = vector.broadcast %cst_14 : f32 to vector<4x6x6xf32>
    %36 = arith.mulf %35, %34 : vector<4x6x6xf32>
    %37 = arith.addf %33, %36 : vector<4x6x6xf32>
    %38 = vector.extract_strided_slice %10 {offsets = [0, 7, 0], sizes = [4, 6, 6], strides = [1, 1, 1]} : vector<4x16x6xf32> to vector<4x6x6xf32>
    %cst_15 = arith.constant 0.109360687 : f32
    %39 = vector.broadcast %cst_15 : f32 to vector<4x6x6xf32>
    %40 = arith.mulf %39, %38 : vector<4x6x6xf32>
    %41 = arith.addf %37, %40 : vector<4x6x6xf32>
    %42 = vector.extract_strided_slice %10 {offsets = [0, 8, 0], sizes = [4, 6, 6], strides = [1, 1, 1]} : vector<4x16x6xf32> to vector<4x6x6xf32>
    %cst_16 = arith.constant 0.0360007733 : f32
    %43 = vector.broadcast %cst_16 : f32 to vector<4x6x6xf32>
    %44 = arith.mulf %43, %42 : vector<4x6x6xf32>
    %45 = arith.addf %41, %44 : vector<4x6x6xf32>
    %46 = vector.extract_strided_slice %10 {offsets = [0, 9, 0], sizes = [4, 6, 6], strides = [1, 1, 1]} : vector<4x16x6xf32> to vector<4x6x6xf32>
    %cst_17 = arith.constant 0.00759875821 : f32
    %47 = vector.broadcast %cst_17 : f32 to vector<4x6x6xf32>
    %48 = arith.mulf %47, %46 : vector<4x6x6xf32>
    %49 = arith.addf %45, %48 : vector<4x6x6xf32>
    %50 = vector.extract_strided_slice %10 {offsets = [0, 10, 0], sizes = [4, 6, 6], strides = [1, 1, 1]} : vector<4x16x6xf32> to vector<4x6x6xf32>
    %cst_18 = arith.constant 0.00102838012 : f32
    %51 = vector.broadcast %cst_18 : f32 to vector<4x6x6xf32>
    %52 = arith.mulf %51, %50 : vector<4x6x6xf32>
    %53 = arith.addf %49, %52 : vector<4x6x6xf32>
    %54 = vector.shape_cast %3 : vector<4x16x16xf32> to vector<64x16xf32>
    %cst_19 = arith.constant dense<0.000000e+00> : vector<64x6xf32>
    %55 = tpu.matmul %54, %4, %cst_19 {dimension_numbers = #tpu.dot_dimension_numbers<[1], [0], [0], [1], [0, 0, 1, 1], [], []>} : vector<64x16xf32>, vector<16x6xf32>, vector<64x6xf32> -> vector<64x6xf32>
    %56 = vector.shape_cast %55 : vector<64x6xf32> to vector<4x16x6xf32>
    %57 = vector.extract_strided_slice %56 {offsets = [0, 0, 0], sizes = [4, 6, 6], strides = [1, 1, 1]} : vector<4x16x6xf32> to vector<4x6x6xf32>
    %cst_20 = arith.constant 0.00102838012 : f32
    %58 = vector.broadcast %cst_20 : f32 to vector<4x6x6xf32>
    %59 = arith.mulf %58, %57 : vector<4x6x6xf32>
    %60 = vector.extract_strided_slice %56 {offsets = [0, 1, 0], sizes = [4, 6, 6], strides = [1, 1, 1]} : vector<4x16x6xf32> to vector<4x6x6xf32>
    %cst_21 = arith.constant 0.00759875821 : f32
    %61 = vector.broadcast %cst_21 : f32 to vector<4x6x6xf32>
    %62 = arith.mulf %61, %60 : vector<4x6x6xf32>
    %63 = arith.addf %59, %62 : vector<4x6x6xf32>
    %64 = vector.extract_strided_slice %56 {offsets = [0, 2, 0], sizes = [4, 6, 6], strides = [1, 1, 1]} : vector<4x16x6xf32> to vector<4x6x6xf32>
    %cst_22 = arith.constant 0.0360007733 : f32
    %65 = vector.broadcast %cst_22 : f32 to vector<4x6x6xf32>
    %66 = arith.mulf %65, %64 : vector<4x6x6xf32>
    %67 = arith.addf %63, %66 : vector<4x6x6xf32>
    %68 = vector.extract_strided_slice %56 {offsets = [0, 3, 0], sizes = [4, 6, 6], strides = [1, 1, 1]} : vector<4x16x6xf32> to vector<4x6x6xf32>
    %cst_23 = arith.constant 0.109360687 : f32
    %69 = vector.broadcast %cst_23 : f32 to vector<4x6x6xf32>
    %70 = arith.mulf %69, %68 : vector<4x6x6xf32>
    %71 = arith.addf %67, %70 : vector<4x6x6xf32>
    %72 = vector.extract_strided_slice %56 {offsets = [0, 4, 0], sizes = [4, 6, 6], strides = [1, 1, 1]} : vector<4x16x6xf32> to vector<4x6x6xf32>
    %cst_24 = arith.constant 0.213005543 : f32
    %73 = vector.broadcast %cst_24 : f32 to vector<4x6x6xf32>
    %74 = arith.mulf %73, %72 : vector<4x6x6xf32>
    %75 = arith.addf %71, %74 : vector<4x6x6xf32>
    %76 = vector.extract_strided_slice %56 {offsets = [0, 5, 0], sizes = [4, 6, 6], strides = [1, 1, 1]} : vector<4x16x6xf32> to vector<4x6x6xf32>
    %cst_25 = arith.constant 0.266011715 : f32
    %77 = vector.broadcast %cst_25 : f32 to vector<4x6x6xf32>
    %78 = arith.mulf %77, %76 : vector<4x6x6xf32>
    %79 = arith.addf %75, %78 : vector<4x6x6xf32>
    %80 = vector.extract_strided_slice %56 {offsets = [0, 6, 0], sizes = [4, 6, 6], strides = [1, 1, 1]} : vector<4x16x6xf32> to vector<4x6x6xf32>
    %cst_26 = arith.constant 0.213005543 : f32
    %81 = vector.broadcast %cst_26 : f32 to vector<4x6x6xf32>
    %82 = arith.mulf %81, %80 : vector<4x6x6xf32>
    %83 = arith.addf %79, %82 : vector<4x6x6xf32>
    %84 = vector.extract_strided_slice %56 {offsets = [0, 7, 0], sizes = [4, 6, 6], strides = [1, 1, 1]} : vector<4x16x6xf32> to vector<4x6x6xf32>
    %cst_27 = arith.constant 0.109360687 : f32
    %85 = vector.broadcast %cst_27 : f32 to vector<4x6x6xf32>
    %86 = arith.mulf %85, %84 : vector<4x6x6xf32>
    %87 = arith.addf %83, %86 : vector<4x6x6xf32>
    %88 = vector.extract_strided_slice %56 {offsets = [0, 8, 0], sizes = [4, 6, 6], strides = [1, 1, 1]} : vector<4x16x6xf32> to vector<4x6x6xf32>
    %cst_28 = arith.constant 0.0360007733 : f32
    %89 = vector.broadcast %cst_28 : f32 to vector<4x6x6xf32>
    %90 = arith.mulf %89, %88 : vector<4x6x6xf32>
    %91 = arith.addf %87, %90 : vector<4x6x6xf32>
    %92 = vector.extract_strided_slice %56 {offsets = [0, 9, 0], sizes = [4, 6, 6], strides = [1, 1, 1]} : vector<4x16x6xf32> to vector<4x6x6xf32>
    %cst_29 = arith.constant 0.00759875821 : f32
    %93 = vector.broadcast %cst_29 : f32 to vector<4x6x6xf32>
    %94 = arith.mulf %93, %92 : vector<4x6x6xf32>
    %95 = arith.addf %91, %94 : vector<4x6x6xf32>
    %96 = vector.extract_strided_slice %56 {offsets = [0, 10, 0], sizes = [4, 6, 6], strides = [1, 1, 1]} : vector<4x16x6xf32> to vector<4x6x6xf32>
    %cst_30 = arith.constant 0.00102838012 : f32
    %97 = vector.broadcast %cst_30 : f32 to vector<4x6x6xf32>
    %98 = arith.mulf %97, %96 : vector<4x6x6xf32>
    %99 = arith.addf %95, %98 : vector<4x6x6xf32>
    %100 = vector.shape_cast %5 : vector<4x16x16xf32> to vector<64x16xf32>
    %cst_31 = arith.constant dense<0.000000e+00> : vector<64x6xf32>
    %101 = tpu.matmul %100, %4, %cst_31 {dimension_numbers = #tpu.dot_dimension_numbers<[1], [0], [0], [1], [0, 0, 1, 1], [], []>} : vector<64x16xf32>, vector<16x6xf32>, vector<64x6xf32> -> vector<64x6xf32>
    %102 = vector.shape_cast %101 : vector<64x6xf32> to vector<4x16x6xf32>
    %103 = vector.extract_strided_slice %102 {offsets = [0, 0, 0], sizes = [4, 6, 6], strides = [1, 1, 1]} : vector<4x16x6xf32> to vector<4x6x6xf32>
    %cst_32 = arith.constant 0.00102838012 : f32
    %104 = vector.broadcast %cst_32 : f32 to vector<4x6x6xf32>
    %105 = arith.mulf %104, %103 : vector<4x6x6xf32>
    %106 = vector.extract_strided_slice %102 {offsets = [0, 1, 0], sizes = [4, 6, 6], strides = [1, 1, 1]} : vector<4x16x6xf32> to vector<4x6x6xf32>
    %cst_33 = arith.constant 0.00759875821 : f32
    %107 = vector.broadcast %cst_33 : f32 to vector<4x6x6xf32>
    %108 = arith.mulf %107, %106 : vector<4x6x6xf32>
    %109 = arith.addf %105, %108 : vector<4x6x6xf32>
    %110 = vector.extract_strided_slice %102 {offsets = [0, 2, 0], sizes = [4, 6, 6], strides = [1, 1, 1]} : vector<4x16x6xf32> to vector<4x6x6xf32>
    %cst_34 = arith.constant 0.0360007733 : f32
    %111 = vector.broadcast %cst_34 : f32 to vector<4x6x6xf32>
    %112 = arith.mulf %111, %110 : vector<4x6x6xf32>
    %113 = arith.addf %109, %112 : vector<4x6x6xf32>
    %114 = vector.extract_strided_slice %102 {offsets = [0, 3, 0], sizes = [4, 6, 6], strides = [1, 1, 1]} : vector<4x16x6xf32> to vector<4x6x6xf32>
    %cst_35 = arith.constant 0.109360687 : f32
    %115 = vector.broadcast %cst_35 : f32 to vector<4x6x6xf32>
    %116 = arith.mulf %115, %114 : vector<4x6x6xf32>
    %117 = arith.addf %113, %116 : vector<4x6x6xf32>
    %118 = vector.extract_strided_slice %102 {offsets = [0, 4, 0], sizes = [4, 6, 6], strides = [1, 1, 1]} : vector<4x16x6xf32> to vector<4x6x6xf32>
    %cst_36 = arith.constant 0.213005543 : f32
    %119 = vector.broadcast %cst_36 : f32 to vector<4x6x6xf32>
    %120 = arith.mulf %119, %118 : vector<4x6x6xf32>
    %121 = arith.addf %117, %120 : vector<4x6x6xf32>
    %122 = vector.extract_strided_slice %102 {offsets = [0, 5, 0], sizes = [4, 6, 6], strides = [1, 1, 1]} : vector<4x16x6xf32> to vector<4x6x6xf32>
    %cst_37 = arith.constant 0.266011715 : f32
    %123 = vector.broadcast %cst_37 : f32 to vector<4x6x6xf32>
    %124 = arith.mulf %123, %122 : vector<4x6x6xf32>
    %125 = arith.addf %121, %124 : vector<4x6x6xf32>
    %126 = vector.extract_strided_slice %102 {offsets = [0, 6, 0], sizes = [4, 6, 6], strides = [1, 1, 1]} : vector<4x16x6xf32> to vector<4x6x6xf32>
    %cst_38 = arith.constant 0.213005543 : f32
    %127 = vector.broadcast %cst_38 : f32 to vector<4x6x6xf32>
    %128 = arith.mulf %127, %126 : vector<4x6x6xf32>
    %129 = arith.addf %125, %128 : vector<4x6x6xf32>
    %130 = vector.extract_strided_slice %102 {offsets = [0, 7, 0], sizes = [4, 6, 6], strides = [1, 1, 1]} : vector<4x16x6xf32> to vector<4x6x6xf32>
    %cst_39 = arith.constant 0.109360687 : f32
    %131 = vector.broadcast %cst_39 : f32 to vector<4x6x6xf32>
    %132 = arith.mulf %131, %130 : vector<4x6x6xf32>
    %133 = arith.addf %129, %132 : vector<4x6x6xf32>
    %134 = vector.extract_strided_slice %102 {offsets = [0, 8, 0], sizes = [4, 6, 6], strides = [1, 1, 1]} : vector<4x16x6xf32> to vector<4x6x6xf32>
    %cst_40 = arith.constant 0.0360007733 : f32
    %135 = vector.broadcast %cst_40 : f32 to vector<4x6x6xf32>
    %136 = arith.mulf %135, %134 : vector<4x6x6xf32>
    %137 = arith.addf %133, %136 : vector<4x6x6xf32>
    %138 = vector.extract_strided_slice %102 {offsets = [0, 9, 0], sizes = [4, 6, 6], strides = [1, 1, 1]} : vector<4x16x6xf32> to vector<4x6x6xf32>
    %cst_41 = arith.constant 0.00759875821 : f32
    %139 = vector.broadcast %cst_41 : f32 to vector<4x6x6xf32>
    %140 = arith.mulf %139, %138 : vector<4x6x6xf32>
    %141 = arith.addf %137, %140 : vector<4x6x6xf32>
    %142 = vector.extract_strided_slice %102 {offsets = [0, 10, 0], sizes = [4, 6, 6], strides = [1, 1, 1]} : vector<4x16x6xf32> to vector<4x6x6xf32>
    %cst_42 = arith.constant 0.00102838012 : f32
    %143 = vector.broadcast %cst_42 : f32 to vector<4x6x6xf32>
    %144 = arith.mulf %143, %142 : vector<4x6x6xf32>
    %145 = arith.addf %141, %144 : vector<4x6x6xf32>
    %146 = vector.shape_cast %6 : vector<4x16x16xf32> to vector<64x16xf32>
    %cst_43 = arith.constant dense<0.000000e+00> : vector<64x6xf32>
    %147 = tpu.matmul %146, %4, %cst_43 {dimension_numbers = #tpu.dot_dimension_numbers<[1], [0], [0], [1], [0, 0, 1, 1], [], []>} : vector<64x16xf32>, vector<16x6xf32>, vector<64x6xf32> -> vector<64x6xf32>
    %148 = vector.shape_cast %147 : vector<64x6xf32> to vector<4x16x6xf32>
    %149 = vector.extract_strided_slice %148 {offsets = [0, 0, 0], sizes = [4, 6, 6], strides = [1, 1, 1]} : vector<4x16x6xf32> to vector<4x6x6xf32>
    %cst_44 = arith.constant 0.00102838012 : f32
    %150 = vector.broadcast %cst_44 : f32 to vector<4x6x6xf32>
    %151 = arith.mulf %150, %149 : vector<4x6x6xf32>
    %152 = vector.extract_strided_slice %148 {offsets = [0, 1, 0], sizes = [4, 6, 6], strides = [1, 1, 1]} : vector<4x16x6xf32> to vector<4x6x6xf32>
    %cst_45 = arith.constant 0.00759875821 : f32
    %153 = vector.broadcast %cst_45 : f32 to vector<4x6x6xf32>
    %154 = arith.mulf %153, %152 : vector<4x6x6xf32>
    %155 = arith.addf %151, %154 : vector<4x6x6xf32>
    %156 = vector.extract_strided_slice %148 {offsets = [0, 2, 0], sizes = [4, 6, 6], strides = [1, 1, 1]} : vector<4x16x6xf32> to vector<4x6x6xf32>
    %cst_46 = arith.constant 0.0360007733 : f32
    %157 = vector.broadcast %cst_46 : f32 to vector<4x6x6xf32>
    %158 = arith.mulf %157, %156 : vector<4x6x6xf32>
    %159 = arith.addf %155, %158 : vector<4x6x6xf32>
    %160 = vector.extract_strided_slice %148 {offsets = [0, 3, 0], sizes = [4, 6, 6], strides = [1, 1, 1]} : vector<4x16x6xf32> to vector<4x6x6xf32>
    %cst_47 = arith.constant 0.109360687 : f32
    %161 = vector.broadcast %cst_47 : f32 to vector<4x6x6xf32>
    %162 = arith.mulf %161, %160 : vector<4x6x6xf32>
    %163 = arith.addf %159, %162 : vector<4x6x6xf32>
    %164 = vector.extract_strided_slice %148 {offsets = [0, 4, 0], sizes = [4, 6, 6], strides = [1, 1, 1]} : vector<4x16x6xf32> to vector<4x6x6xf32>
    %cst_48 = arith.constant 0.213005543 : f32
    %165 = vector.broadcast %cst_48 : f32 to vector<4x6x6xf32>
    %166 = arith.mulf %165, %164 : vector<4x6x6xf32>
    %167 = arith.addf %163, %166 : vector<4x6x6xf32>
    %168 = vector.extract_strided_slice %148 {offsets = [0, 5, 0], sizes = [4, 6, 6], strides = [1, 1, 1]} : vector<4x16x6xf32> to vector<4x6x6xf32>
    %cst_49 = arith.constant 0.266011715 : f32
    %169 = vector.broadcast %cst_49 : f32 to vector<4x6x6xf32>
    %170 = arith.mulf %169, %168 : vector<4x6x6xf32>
    %171 = arith.addf %167, %170 : vector<4x6x6xf32>
    %172 = vector.extract_strided_slice %148 {offsets = [0, 6, 0], sizes = [4, 6, 6], strides = [1, 1, 1]} : vector<4x16x6xf32> to vector<4x6x6xf32>
    %cst_50 = arith.constant 0.213005543 : f32
    %173 = vector.broadcast %cst_50 : f32 to vector<4x6x6xf32>
    %174 = arith.mulf %173, %172 : vector<4x6x6xf32>
    %175 = arith.addf %171, %174 : vector<4x6x6xf32>
    %176 = vector.extract_strided_slice %148 {offsets = [0, 7, 0], sizes = [4, 6, 6], strides = [1, 1, 1]} : vector<4x16x6xf32> to vector<4x6x6xf32>
    %cst_51 = arith.constant 0.109360687 : f32
    %177 = vector.broadcast %cst_51 : f32 to vector<4x6x6xf32>
    %178 = arith.mulf %177, %176 : vector<4x6x6xf32>
    %179 = arith.addf %175, %178 : vector<4x6x6xf32>
    %180 = vector.extract_strided_slice %148 {offsets = [0, 8, 0], sizes = [4, 6, 6], strides = [1, 1, 1]} : vector<4x16x6xf32> to vector<4x6x6xf32>
    %cst_52 = arith.constant 0.0360007733 : f32
    %181 = vector.broadcast %cst_52 : f32 to vector<4x6x6xf32>
    %182 = arith.mulf %181, %180 : vector<4x6x6xf32>
    %183 = arith.addf %179, %182 : vector<4x6x6xf32>
    %184 = vector.extract_strided_slice %148 {offsets = [0, 9, 0], sizes = [4, 6, 6], strides = [1, 1, 1]} : vector<4x16x6xf32> to vector<4x6x6xf32>
    %cst_53 = arith.constant 0.00759875821 : f32
    %185 = vector.broadcast %cst_53 : f32 to vector<4x6x6xf32>
    %186 = arith.mulf %185, %184 : vector<4x6x6xf32>
    %187 = arith.addf %183, %186 : vector<4x6x6xf32>
    %188 = vector.extract_strided_slice %148 {offsets = [0, 10, 0], sizes = [4, 6, 6], strides = [1, 1, 1]} : vector<4x16x6xf32> to vector<4x6x6xf32>
    %cst_54 = arith.constant 0.00102838012 : f32
    %189 = vector.broadcast %cst_54 : f32 to vector<4x6x6xf32>
    %190 = arith.mulf %189, %188 : vector<4x6x6xf32>
    %191 = arith.addf %187, %190 : vector<4x6x6xf32>
    %192 = vector.shape_cast %7 : vector<4x16x16xf32> to vector<64x16xf32>
    %cst_55 = arith.constant dense<0.000000e+00> : vector<64x6xf32>
    %193 = tpu.matmul %192, %4, %cst_55 {dimension_numbers = #tpu.dot_dimension_numbers<[1], [0], [0], [1], [0, 0, 1, 1], [], []>} : vector<64x16xf32>, vector<16x6xf32>, vector<64x6xf32> -> vector<64x6xf32>
    %194 = vector.shape_cast %193 : vector<64x6xf32> to vector<4x16x6xf32>
    %195 = vector.extract_strided_slice %194 {offsets = [0, 0, 0], sizes = [4, 6, 6], strides = [1, 1, 1]} : vector<4x16x6xf32> to vector<4x6x6xf32>
    %cst_56 = arith.constant 0.00102838012 : f32
    %196 = vector.broadcast %cst_56 : f32 to vector<4x6x6xf32>
    %197 = arith.mulf %196, %195 : vector<4x6x6xf32>
    %198 = vector.extract_strided_slice %194 {offsets = [0, 1, 0], sizes = [4, 6, 6], strides = [1, 1, 1]} : vector<4x16x6xf32> to vector<4x6x6xf32>
    %cst_57 = arith.constant 0.00759875821 : f32
    %199 = vector.broadcast %cst_57 : f32 to vector<4x6x6xf32>
    %200 = arith.mulf %199, %198 : vector<4x6x6xf32>
    %201 = arith.addf %197, %200 : vector<4x6x6xf32>
    %202 = vector.extract_strided_slice %194 {offsets = [0, 2, 0], sizes = [4, 6, 6], strides = [1, 1, 1]} : vector<4x16x6xf32> to vector<4x6x6xf32>
    %cst_58 = arith.constant 0.0360007733 : f32
    %203 = vector.broadcast %cst_58 : f32 to vector<4x6x6xf32>
    %204 = arith.mulf %203, %202 : vector<4x6x6xf32>
    %205 = arith.addf %201, %204 : vector<4x6x6xf32>
    %206 = vector.extract_strided_slice %194 {offsets = [0, 3, 0], sizes = [4, 6, 6], strides = [1, 1, 1]} : vector<4x16x6xf32> to vector<4x6x6xf32>
    %cst_59 = arith.constant 0.109360687 : f32
    %207 = vector.broadcast %cst_59 : f32 to vector<4x6x6xf32>
    %208 = arith.mulf %207, %206 : vector<4x6x6xf32>
    %209 = arith.addf %205, %208 : vector<4x6x6xf32>
    %210 = vector.extract_strided_slice %194 {offsets = [0, 4, 0], sizes = [4, 6, 6], strides = [1, 1, 1]} : vector<4x16x6xf32> to vector<4x6x6xf32>
    %cst_60 = arith.constant 0.213005543 : f32
    %211 = vector.broadcast %cst_60 : f32 to vector<4x6x6xf32>
    %212 = arith.mulf %211, %210 : vector<4x6x6xf32>
    %213 = arith.addf %209, %212 : vector<4x6x6xf32>
    %214 = vector.extract_strided_slice %194 {offsets = [0, 5, 0], sizes = [4, 6, 6], strides = [1, 1, 1]} : vector<4x16x6xf32> to vector<4x6x6xf32>
    %cst_61 = arith.constant 0.266011715 : f32
    %215 = vector.broadcast %cst_61 : f32 to vector<4x6x6xf32>
    %216 = arith.mulf %215, %214 : vector<4x6x6xf32>
    %217 = arith.addf %213, %216 : vector<4x6x6xf32>
    %218 = vector.extract_strided_slice %194 {offsets = [0, 6, 0], sizes = [4, 6, 6], strides = [1, 1, 1]} : vector<4x16x6xf32> to vector<4x6x6xf32>
    %cst_62 = arith.constant 0.213005543 : f32
    %219 = vector.broadcast %cst_62 : f32 to vector<4x6x6xf32>
    %220 = arith.mulf %219, %218 : vector<4x6x6xf32>
    %221 = arith.addf %217, %220 : vector<4x6x6xf32>
    %222 = vector.extract_strided_slice %194 {offsets = [0, 7, 0], sizes = [4, 6, 6], strides = [1, 1, 1]} : vector<4x16x6xf32> to vector<4x6x6xf32>
    %cst_63 = arith.constant 0.109360687 : f32
    %223 = vector.broadcast %cst_63 : f32 to vector<4x6x6xf32>
    %224 = arith.mulf %223, %222 : vector<4x6x6xf32>
    %225 = arith.addf %221, %224 : vector<4x6x6xf32>
    %226 = vector.extract_strided_slice %194 {offsets = [0, 8, 0], sizes = [4, 6, 6], strides = [1, 1, 1]} : vector<4x16x6xf32> to vector<4x6x6xf32>
    %cst_64 = arith.constant 0.0360007733 : f32
    %227 = vector.broadcast %cst_64 : f32 to vector<4x6x6xf32>
    %228 = arith.mulf %227, %226 : vector<4x6x6xf32>
    %229 = arith.addf %225, %228 : vector<4x6x6xf32>
    %230 = vector.extract_strided_slice %194 {offsets = [0, 9, 0], sizes = [4, 6, 6], strides = [1, 1, 1]} : vector<4x16x6xf32> to vector<4x6x6xf32>
    %cst_65 = arith.constant 0.00759875821 : f32
    %231 = vector.broadcast %cst_65 : f32 to vector<4x6x6xf32>
    %232 = arith.mulf %231, %230 : vector<4x6x6xf32>
    %233 = arith.addf %229, %232 : vector<4x6x6xf32>
    %234 = vector.extract_strided_slice %194 {offsets = [0, 10, 0], sizes = [4, 6, 6], strides = [1, 1, 1]} : vector<4x16x6xf32> to vector<4x6x6xf32>
    %cst_66 = arith.constant 0.00102838012 : f32
    %235 = vector.broadcast %cst_66 : f32 to vector<4x6x6xf32>
    %236 = arith.mulf %235, %234 : vector<4x6x6xf32>
    %237 = arith.addf %233, %236 : vector<4x6x6xf32>
    %238 = arith.mulf %53, %53 : vector<4x6x6xf32>
    %239 = arith.mulf %99, %99 : vector<4x6x6xf32>
    %240 = arith.mulf %53, %99 : vector<4x6x6xf32>
    %241 = arith.subf %145, %238 : vector<4x6x6xf32>
    %242 = arith.subf %191, %239 : vector<4x6x6xf32>
    %243 = arith.subf %237, %240 : vector<4x6x6xf32>
    %cst_67 = arith.constant 2.000000e+00 : f32
    %244 = vector.broadcast %cst_67 : f32 to vector<4x6x6xf32>
    %245 = arith.mulf %244, %243 : vector<4x6x6xf32>
    %246 = vector.broadcast %1 : f32 to vector<4x6x6xf32>
    %247 = arith.addf %245, %246 : vector<4x6x6xf32>
    %248 = arith.addf %241, %242 : vector<4x6x6xf32>
    %249 = vector.broadcast %1 : f32 to vector<4x6x6xf32>
    %250 = arith.addf %248, %249 : vector<4x6x6xf32>
    %cst_68 = arith.constant 2.000000e+00 : f32
    %251 = vector.broadcast %cst_68 : f32 to vector<4x6x6xf32>
    %252 = arith.mulf %251, %240 : vector<4x6x6xf32>
    %253 = vector.broadcast %0 : f32 to vector<4x6x6xf32>
    %254 = arith.addf %252, %253 : vector<4x6x6xf32>
    %255 = arith.mulf %254, %247 : vector<4x6x6xf32>
    %256 = arith.addf %238, %239 : vector<4x6x6xf32>
    %257 = vector.broadcast %0 : f32 to vector<4x6x6xf32>
    %258 = arith.addf %256, %257 : vector<4x6x6xf32>
    %259 = arith.mulf %258, %250 : vector<4x6x6xf32>
    %260 = tpu.reciprocal %259 {approx = true} : vector<4x6x6xf32> -> vector<4x6x6xf32>
    %261 = arith.mulf %255, %260 : vector<4x6x6xf32>
    %262 = vector.shape_cast %261 : vector<4x6x6xf32> to vector<1x4x6x6xf32>
    %cst_69 = arith.constant dense<0.000000e+00> : vector<1xf32>
    %263 = vector.multi_reduction <add>, %262, %cst_69 [1, 2, 3] : vector<1x4x6x6xf32> to vector<1xf32>
    %264 = vector.shape_cast %263 : vector<1xf32> to vector<1x1x1x1xf32>
    %265 = vector.extract %264[0, 0, 0, 0] : f32 from vector<1x1x1x1xf32>
    %cst_70 = arith.constant 0.00347222225 : f32
    %266 = arith.mulf %265, %cst_70 : f32
    %c0_i32 = arith.constant 0 : i32
    %267 = arith.cmpi eq, %arg0, %c0_i32 : i32
    %268 = arith.extui %267 : i1 to i32
    %c0_i32_71 = arith.constant 0 : i32
    %269 = arith.cmpi ne, %268, %c0_i32_71 : i32
    scf.if %269 {
      %cst_76 = arith.constant 0.000000e+00 : f32
      %274 = vector.broadcast %cst_76 : f32 to vector<1x1xf32>
      %c0_77 = arith.constant 0 : index
      %c0_78 = arith.constant 0 : index
      %275 = vector.load %arg5[%c0_77, %c0_78] : memref<1x1xf32, #tpu.memory_space<vmem>>, vector<1x1xf32>
      tpu.vector_store %arg5[%c0_77, %c0_78], %274 {strides = array<i32>} : memref<1x1xf32, #tpu.memory_space<vmem>>, vector<1x1xf32>,
    } else {
    }
    %c0_72 = arith.constant 0 : index
    %c0_73 = arith.constant 0 : index
    %270 = vector.load %arg5[%c0_72, %c0_73] : memref<1x1xf32, #tpu.memory_space<vmem>>, vector<1x1xf32>
    %271 = vector.broadcast %266 : f32 to vector<1x1xf32>
    %272 = arith.addf %270, %271 : vector<1x1xf32>
    %c0_74 = arith.constant 0 : index
    %c0_75 = arith.constant 0 : index
    %273 = vector.load %arg5[%c0_74, %c0_75] : memref<1x1xf32, #tpu.memory_space<vmem>>, vector<1x1xf32>
    tpu.vector_store %arg5[%c0_74, %c0_75], %272 {strides = array<i32>} : memref<1x1xf32, #tpu.memory_space<vmem>>, vector<1x1xf32>,
    return
  }
  func.func @transform_0(%arg0: i32) -> i32 {
    %c0_i32 = arith.constant 0 : i32
    %c0_i32_0 = arith.constant 0 : i32
    return %c0_i32 : i32
  }
  func.func @transform_1(%arg0: i32) -> (i32, i32, i32) {
    %c0_i32 = arith.constant 0 : i32
    %c0_i32_0 = arith.constant 0 : i32
    %c0_i32_1 = arith.constant 0 : i32
    return %arg0, %c0_i32, %c0_i32_0 : i32, i32, i32
  }
  func.func @transform_2(%arg0: i32) -> (i32, i32, i32) {
    %c0_i32 = arith.constant 0 : i32
    %c0_i32_0 = arith.constant 0 : i32
    %c0_i32_1 = arith.constant 0 : i32
    return %arg0, %c0_i32, %c0_i32_0 : i32, i32, i32
  }
  func.func @transform_3(%arg0: i32) -> (i32, i32) {
    %c0_i32 = arith.constant 0 : i32
    %c0_i32_0 = arith.constant 0 : i32
    %c0_i32_1 = arith.constant 0 : i32
    return %c0_i32, %c0_i32_0 : i32, i32
  }
  func.func @transform_4(%arg0: i32) -> (i32, i32) {
    %c0_i32 = arith.constant 0 : i32
    %c0_i32_0 = arith.constant 0 : i32
    %c0_i32_1 = arith.constant 0 : i32
    return %c0_i32, %c0_i32_0 : i32, i32
  }
}

</mosaic_0001>

<llo_original>
// kernel: tpu_custom_call.1
$region0: #{tpu_custom_call.1}
  #allocation0 [shape = 'u32[]', space=smem, size = 0x4, offset = 0x4, fixed_abs, tag = 'smem constant byte address 0x4 - core index']
  #allocation1 [shape = 'u32[144,128]{1,0:T(1,128)}', space=vmem, size = 0x12000, scoped, tag = 'internal scratch']
  %s0 = inlined_call_operand.vmem [shape: f32[2], index: 0, kind: input, shape index: {}]
  %s1 = inlined_call_operand.hbm [shape: f32[8,16,16], index: 1, kind: input, shape index: {}]
  %s2 = inlined_call_operand.hbm [shape: f32[8,16,16], index: 2, kind: input, shape index: {}]
  %s3 = inlined_call_operand.vmem [shape: f32[16,6], index: 3, kind: input, shape index: {}]
  %s4 = inlined_call_operand.hbm [shape: f32[1,1], index: 4, kind: output, shape index: {}]
  %s5 = sld [smem:[#allocation0]]
  $region65: #{tpu_custom_call.1} parent=0
    _
  %s7 = ssub.s32 1, %s5
  %s8 = scalar_select 0, %s7, %s5
  $region1: #{tpu_custom_call.1} parent=0
    #allocation2 [shape = 'u8[512]{0}', space=smem, size = 0x200, scoped, tag = 'input window, operand 0, single buffered']
    #allocation3 [shape = 's32[2]{0}', space=sflag, size = 0x8, scoped, tag = 'scoped memory for tpu_custom_call.1']
    #allocation4 [shape = 's32[2]{0}', space=sflag, size = 0x8, scoped, tag = 'scoped memory for tpu_custom_call.1']
    #allocation5 [shape = 's32[2]{0}', space=sflag, size = 0x8, scoped, tag = 'scoped memory for tpu_custom_call.1']
    #allocation6 [shape = 'u8[65536]{0}', space=vmem, size = 0x10000, scoped, tag = 'input window, operand 1']
    #allocation7 [shape = 'u8[65536]{0}', space=vmem, size = 0x10000, scoped, tag = 'input window, operand 2']
    #allocation8 [shape = 's32[2]{0}', space=sflag, size = 0x8, scoped, tag = 'scoped memory for tpu_custom_call.1']
    #allocation9 [shape = 'u8[512]{0}', space=vmem, size = 0x400, scoped, tag = 'output window, operand 0, single buffered']
    %9 = vsyncpa [#allocation5], 0
    %10 = vsyncpa [#allocation3], 0
    %s11 = scalar_lea.sflag [#allocation3], 1
    %12 = vsyncpa %s11, 0
    %13 = vsyncpa [#allocation8], 0
    %s14 = scalar_lea.sflag [#allocation8], 1
    %15 = vsyncpa %s14, 0
    %16 = vsyncpa [#allocation4], 0
    loop: start=0, step=1, limit=4
    $region2: #{tpu_custom_call.1} parent=1 // loop_pre_header
      _
    $region3: #{tpu_custom_call.1} parent=1 // loop_header
      %s18 = sphi 0, %s22
      %p19 = scmp.ge.s32.totalorder %s18, 4
      %s26 = sphi 0, %s26
      %s28 = sphi 0, %s26
      %s29 = sphi 0, %s28
      %s43 = sphi 0, %s29
      %s49 = sphi 0, %s51
      %s52 = sphi 0, %s49
      %s53 = sphi 0, %s52
      %s69 = sphi 0, %s53
      %s75 = sphi 0, %s77
      %s78 = sphi 0, %s75
      %s79 = sphi 0, %s78
      %s95 = sphi 0, %s79
      %s99 = sphi 0, %s99
      %s101 = sphi 0, %s99
      %s102 = sphi 0, %s101
      %s116 = sphi 0, %s102
      %s120 = sphi 0, %s120
      %s122 = sphi 0, %s120
      %s123 = sphi 0, %s122
      %s137 = sphi 0, %s123
    $region4: #{tpu_custom_call.1} parent=1 // loop_header_branch
      %21 = sbr.rel (%p19) target = $region8
    $region5: #{tpu_custom_call.1} parent=1 // loop_body
      %s23 = ssub.s32 %s18, 1
      %s24 = ssub.s32 %s18, 2
      %s25 = sadd.s32 %s18, 1
      %s27 = sadd.s32 %s26, 1
      %p30 = scmp.eq.s32.totalorder %s18, 1
      %p31 = scmp.ne.s32.totalorder %s26, %s28
      %p32 = scmp.eq.s32.totalorder %s18, 0
      %p33 = por %p31, %p32
      %p34 = scmp.ne.s32.totalorder %s26, %s28
      %p35 = scmp.eq.s32.totalorder %s23, 1
      %p36 = por %p34, %p35
      %p37 = scmp.ne.s32.totalorder %s28, %s29
      %p38 = scmp.eq.s32.totalorder %s23, 0
      %p39 = por %p37, %p38
      %p40 = scmp.ne.s32.totalorder %s28, %s29
      %p41 = scmp.eq.s32.totalorder %s24, 1
      %p42 = por %p40, %p41
      %p44 = scmp.ne.s32.totalorder %s29, %s43
      %p45 = scmp.eq.s32.totalorder %s24, 0
      %p46 = por %p44, %p45
      %s47 = ssub.s32 %s18, %s25
      %p48 = scmp.eq.s32.totalorder %s47, 0
      %s50 = sadd.s32 %s49, 1
      %s51 = scalar_select %p48, %s49, %s50
      %p54 = pneg %p48
      %p55 = scmp.eq.s32.totalorder %s18, 1
      %p56 = por %p54, %p55
      %p57 = scmp.ne.s32.totalorder %s49, %s52
      %p58 = scmp.eq.s32.totalorder %s18, 0
      %p59 = por %p57, %p58
      %p60 = scmp.ne.s32.totalorder %s49, %s52
      %p61 = scmp.eq.s32.totalorder %s23, 1
      %p62 = por %p60, %p61
      %p63 = scmp.ne.s32.totalorder %s52, %s53
      %p64 = scmp.eq.s32.totalorder %s23, 0
      %p65 = por %p63, %p64
      %p66 = scmp.ne.s32.totalorder %s52, %s53
      %p67 = scmp.eq.s32.totalorder %s24, 1
      %p68 = por %p66, %p67
      %p70 = scmp.ne.s32.totalorder %s53, %s69
      %p71 = scmp.eq.s32.totalorder %s24, 0
      %p72 = por %p70, %p71
      %s73 = ssub.s32 %s18, %s25
      %p74 = scmp.eq.s32.totalorder %s73, 0
      %s76 = sadd.s32 %s75, 1
      %s77 = scalar_select %p74, %s75, %s76
      %p80 = pneg %p74
      %p81 = scmp.eq.s32.totalorder %s18, 1
      %p82 = por %p80, %p81
      %p83 = scmp.ne.s32.totalorder %s75, %s78
      %p84 = scmp.eq.s32.totalorder %s18, 0
      %p85 = por %p83, %p84
      %p86 = scmp.ne.s32.totalorder %s75, %s78
      %p87 = scmp.eq.s32.totalorder %s23, 1
      %p88 = por %p86, %p87
      %p89 = scmp.ne.s32.totalorder %s78, %s79
      %p90 = scmp.eq.s32.totalorder %s23, 0
      %p91 = por %p89, %p90
      %p92 = scmp.ne.s32.totalorder %s78, %s79
      %p93 = scmp.eq.s32.totalorder %s24, 1
      %p94 = por %p92, %p93
      %p96 = scmp.ne.s32.totalorder %s79, %s95
      %p97 = scmp.eq.s32.totalorder %s24, 0
      %p98 = por %p96, %p97
      %s100 = sadd.s32 %s99, 1
      %p103 = scmp.eq.s32.totalorder %s18, 1
      %p104 = scmp.ne.s32.totalorder %s99, %s101
      %p105 = scmp.eq.s32.totalorder %s18, 0
      %p106 = por %p104, %p105
      %p107 = scmp.ne.s32.totalorder %s99, %s101
      %p108 = scmp.eq.s32.totalorder %s23, 1
      %p109 = por %p107, %p108
      %p110 = scmp.ne.s32.totalorder %s101, %s102
      %p111 = scmp.eq.s32.totalorder %s23, 0
      %p112 = por %p110, %p111
      %p113 = scmp.ne.s32.totalorder %s101, %s102
      %p114 = scmp.eq.s32.totalorder %s24, 1
      %p115 = por %p113, %p114
      %p117 = scmp.ne.s32.totalorder %s102, %s116
      %p118 = scmp.eq.s32.totalorder %s24, 0
      %p119 = por %p117, %p118
      %s121 = sadd.s32 %s120, 1
      %p124 = scmp.eq.s32.totalorder %s18, 1
      %p125 = scmp.ne.s32.totalorder %s120, %s122
      %p126 = scmp.eq.s32.totalorder %s18, 0
      %p127 = por %p125, %p126
      %p128 = scmp.ne.s32.totalorder %s120, %s122
      %p129 = scmp.eq.s32.totalorder %s23, 1
      %p130 = por %p128, %p129
      %p131 = scmp.ne.s32.totalorder %s122, %s123
      %p132 = scmp.eq.s32.totalorder %s23, 0
      %p133 = por %p131, %p132
      %p134 = scmp.ne.s32.totalorder %s122, %s123
      %p135 = scmp.eq.s32.totalorder %s24, 1
      %p136 = por %p134, %p135
      %p138 = scmp.ne.s32.totalorder %s123, %s137
      %p139 = scmp.eq.s32.totalorder %s24, 0
      %p140 = por %p138, %p139
      %p141 = scmp.le.s32.totalorder 1, %s18
      %p142 = scmp.lt.s32.totalorder %s18, 3
      %p143 = pnand %p141, %p142
      %p144 = pneg %p143
      // Predicated region
      $region9: #{tpu_custom_call.1} parent=5 // pred_check
        _
      $region10: #{tpu_custom_call.1} parent=5 // pred_check_branch
        %146 = sbr.rel (%p143) target = $region12
      $region11: #{tpu_custom_call.1} parent=5 // pred_region
        %s147 = ssub.s32 %s18, 1
        // Predicated region
        $region13: #{tpu_custom_call.1} parent=11 // pred_check
          %p148 = pneg %p39
        $region14: #{tpu_custom_call.1} parent=11 // pred_check_branch
          %150 = sbr.rel (%p148) target = $region16
        $region15: #{tpu_custom_call.1} parent=11 // pred_region
          %s152 = ssub.s32 16, 16
          %153 = vsyncadd [#allocation5], %s152
          %s155 = sshll.u32 %s0, 4
          %s156 = int_to_ptr.vmem [resolvable:$true] %s155
          %158 = dma.vmem_to_smem %s156, 16, [#allocation2], [#allocation5]
        $region16: #{tpu_custom_call.1} parent=11 // pred_fallthru
          _
        // Predicated region
        $region17: #{tpu_custom_call.1} parent=11 // pred_check
          %p159 = pneg %p112
        $region18: #{tpu_custom_call.1} parent=11 // pred_check_branch
          %161 = sbr.rel (%p159) target = $region20
        $region19: #{tpu_custom_call.1} parent=11 // pred_region
          _
        $region20: #{tpu_custom_call.1} parent=11 // pred_fallthru
          _
      $region12: #{tpu_custom_call.1} parent=5 // pred_fallthru
        _
      %p162 = scmp.lt.s32.totalorder %s18, 2
      // Predicated region
      $region21: #{tpu_custom_call.1} parent=5 // pred_check
        %p163 = pneg %p162
      $region22: #{tpu_custom_call.1} parent=5 // pred_check_branch
        %165 = sbr.rel (%p163) target = $region24
      $region23: #{tpu_custom_call.1} parent=5 // pred_region
        // Predicated region
        $region25: #{tpu_custom_call.1} parent=23 // pred_check
          %p166 = pneg %p59
        $region26: #{tpu_custom_call.1} parent=23 // pred_check_branch
          %168 = sbr.rel (%p166) target = $region28
        $region27: #{tpu_custom_call.1} parent=23 // pred_region
          %s169 = sand.u32 %s49, 1
          %s170 = scalar_lea.sflag [#allocation3], %s169
          %s171 = sand.u32 %s49, 1
          %s172 = smul.addr %s171, 64
          %s173 = scalar_lea.vmem [#allocation6], %s172
          %s174 = smul.u32 4, %s18
          %s176 = ssub.s32 1024, 1024
          %177 = vsyncadd %s170, %s176
          %s178 = smul.addr %s174, 2
          %s179 = smul.addr %s178, 128
          %s180 = scalar_lea.hbm %s1, %s179
          %s181 = sshll.u32 %s173, 4
          %s182 = int_to_ptr.vmem [resolvable:$true] %s181
          %187 = dma.hbm_to_vmem [thread:$0]  %s180, 1024, %s182, %s170, 128, 128, 8
        $region28: #{tpu_custom_call.1} parent=23 // pred_fallthru
          _
        // Predicated region
        $region29: #{tpu_custom_call.1} parent=23 // pred_check
          %p188 = pneg %p85
        $region30: #{tpu_custom_call.1} parent=23 // pred_check_branch
          %190 = sbr.rel (%p188) target = $region32
        $region31: #{tpu_custom_call.1} parent=23 // pred_region
          %s191 = sand.u32 %s75, 1
          %s192 = scalar_lea.sflag [#allocation8], %s191
          %s193 = sand.u32 %s75, 1
          %s194 = smul.addr %s193, 64
          %s195 = scalar_lea.vmem [#allocation7], %s194
          %s196 = smul.u32 4, %s18
          %s198 = ssub.s32 1024, 1024
          %199 = vsyncadd %s192, %s198
          %s200 = smul.addr %s196, 2
          %s201 = smul.addr %s200, 128
          %s202 = scalar_lea.hbm %s2, %s201
          %s203 = sshll.u32 %s195, 4
          %s204 = int_to_ptr.vmem [resolvable:$true] %s203
          %209 = dma.hbm_to_vmem [thread:$0]  %s202, 1024, %s204, %s192, 128, 128, 8
        $region32: #{tpu_custom_call.1} parent=23 // pred_fallthru
          _
      $region24: #{tpu_custom_call.1} parent=5 // pred_fallthru
        _
      %p210 = scmp.le.s32.totalorder 1, %s18
      %p211 = scmp.lt.s32.totalorder %s18, 3
      %p212 = pnand %p210, %p211
      %p213 = pneg %p212
      // Predicated region
      $region33: #{tpu_custom_call.1} parent=5 // pred_check
        _
      $region34: #{tpu_custom_call.1} parent=5 // pred_check_branch
        %215 = sbr.rel (%p212) target = $region36
      $region35: #{tpu_custom_call.1} parent=5 // pred_region
        %s216 = ssub.s32 %s18, 1
        // Predicated region
        $region37: #{tpu_custom_call.1} parent=35 // pred_check
          %p217 = pneg %p39
        $region38: #{tpu_custom_call.1} parent=35 // pred_check_branch
          %219 = sbr.rel (%p217) target = $region40
        $region39: #{tpu_custom_call.1} parent=35 // pred_region
          %220 = dma.done [#allocation5], 16
        $region40: #{tpu_custom_call.1} parent=35 // pred_fallthru
          _
        %s221 = sand.u32 %s52, 1
        %s222 = scalar_lea.sflag [#allocation3], %s221
        %s223 = sand.u32 %s52, 1
        %s224 = smul.addr %s223, 64
        %s225 = scalar_lea.vmem [#allocation6], %s224
        // Predicated region
        $region41: #{tpu_custom_call.1} parent=35 // pred_check
          %p226 = pneg %p65
        $region42: #{tpu_custom_call.1} parent=35 // pred_check_branch
          %228 = sbr.rel (%p226) target = $region44
        $region43: #{tpu_custom_call.1} parent=35 // pred_region
          %229 = dma.done %s222, 1024
        $region44: #{tpu_custom_call.1} parent=35 // pred_fallthru
          _
        %s230 = sand.u32 %s78, 1
        %s231 = scalar_lea.sflag [#allocation8], %s230
        %s232 = sand.u32 %s78, 1
        %s233 = smul.addr %s232, 64
        %s234 = scalar_lea.vmem [#allocation7], %s233
        // Predicated region
        $region45: #{tpu_custom_call.1} parent=35 // pred_check
          %p235 = pneg %p91
        $region46: #{tpu_custom_call.1} parent=35 // pred_check_branch
          %237 = sbr.rel (%p235) target = $region48
        $region47: #{tpu_custom_call.1} parent=35 // pred_region
          %238 = dma.done %s231, 1024
        $region48: #{tpu_custom_call.1} parent=35 // pred_fallthru
          _
        %239 = sfence
        %p240 = pneg %p39
        %p241 = pneg %p36
        %s242 = sand.u32 %s52, 1
        %s243 = scalar_lea.sflag [#allocation3], %s242
        %s244 = sand.u32 %s52, 1
        %s245 = smul.addr %s244, 64
        %s246 = scalar_lea.vmem [#allocation6], %s245
        %p247 = pneg %p65
        %p248 = pneg %p62
        %s249 = sand.u32 %s78, 1
        %s250 = scalar_lea.sflag [#allocation8], %s249
        %s251 = sand.u32 %s78, 1
        %s252 = smul.addr %s251, 64
        %s253 = scalar_lea.vmem [#allocation7], %s252
        %p254 = pneg %p91
        %p255 = pneg %p88
        %p256 = pneg %p112
        %p257 = pneg %p109
        %p258 = pneg %p133
        %p259 = pneg %p130
        %s260 = smul.u32 4, %s23
        %s261 = smul.u32 4, %s23
        %s262 = sld [smem:[#allocation2]]
        %s263 = sld [smem:[#allocation2 + $0x1]]
        %v264 = vld [vmem:[%s225] sm:$0xff]
        %v265 = vld [vmem:[%s225 + $0x8] sm:$0xff]
        %v266 = vld [vmem:[%s225 + $0x10] sm:$0xff]
        %v267 = vld [vmem:[%s225 + $0x18] sm:$0xff]
        %v268 = vld [vmem:[%s225 + $0x20] sm:$0xff]
        %v269 = vld [vmem:[%s225 + $0x28] sm:$0xff]
        %v270 = vld [vmem:[%s225 + $0x30] sm:$0xff]
        %v271 = vld [vmem:[%s225 + $0x38] sm:$0xff]
        %v272 = vld [vmem:[%s234] sm:$0xff]
        %v273 = vld [vmem:[%s234 + $0x8] sm:$0xff]
        %v274 = vld [vmem:[%s234 + $0x10] sm:$0xff]
        %v275 = vld [vmem:[%s234 + $0x18] sm:$0xff]
        %v276 = vld [vmem:[%s234 + $0x20] sm:$0xff]
        %v277 = vld [vmem:[%s234 + $0x28] sm:$0xff]
        %v278 = vld [vmem:[%s234 + $0x30] sm:$0xff]
        %v279 = vld [vmem:[%s234 + $0x38] sm:$0xff]
        %v280 = vld [vmem:[%s3] sm:$0xff]
        %v281 = vld [vmem:[%s3 + $0x8] sm:$0xff]
        %v282 = vmul.f32 %v264, %v264
        %v283 = vmul.f32 %v265, %v265
        %v284 = vmul.f32 %v266, %v266
        %v285 = vmul.f32 %v267, %v267
        %v286 = vmul.f32 %v268, %v268
        %v287 = vmul.f32 %v269, %v269
        %v288 = vmul.f32 %v270, %v270
        %v289 = vmul.f32 %v271, %v271
        %v290 = vmul.f32 %v272, %v272
        %v291 = vmul.f32 %v273, %v273
        %v292 = vmul.f32 %v274, %v274
        %v293 = vmul.f32 %v275, %v275
        %v294 = vmul.f32 %v276, %v276
        %v295 = vmul.f32 %v277, %v277
        %v296 = vmul.f32 %v278, %v278
        %v297 = vmul.f32 %v279, %v279
        %v298 = vmul.f32 %v264, %v272
        %v299 = vmul.f32 %v265, %v273
        %v300 = vmul.f32 %v266, %v274
        %v301 = vmul.f32 %v267, %v275
        %v302 = vmul.f32 %v268, %v276
        %v303 = vmul.f32 %v269, %v277
        %v304 = vmul.f32 %v270, %v278
        %v305 = vmul.f32 %v271, %v279
        %vm306 = vcmask 130048
        %v308 = vsel %vm306, %v264, 0
        %v311 = vsel %vm306, %v265, 0
        %v314 = vsel %vm306, %v266, 0
        %v317 = vsel %vm306, %v267, 0
        %v320 = vsel %vm306, %v268, 0
        %v323 = vsel %vm306, %v269, 0
        %v326 = vsel %vm306, %v270, 0
        %v329 = vsel %vm306, %v271, 0
        %331 = vmatprep.subr.mxu0 0.0
        %332 = vmatpush1.msra.mxu0 0.0
        %333 = vmatprep.subr.mxu0 0.0
        %334 = vmatpush1.msra.mxu0 0.0
        %335 = vmatprep.subr.mxu0 0.0
        %336 = vmatpush1.msra.mxu0 0.0
        %337 = vmatprep.subr.mxu0 0.0
        %338 = vmatpush1.msra.mxu0 0.0
        %339 = vmatprep.subr.mxu0 0.0
        %340 = vmatpush1.msra.mxu0 0.0
        %341 = vmatprep.subr.mxu0 0.0
        %342 = vmatpush1.msra.mxu0 0.0
        %343 = vmatprep.subr.mxu0 0.0
        %344 = vmatpush1.msra.mxu0 0.0
        %345 = vmatprep.subr.mxu0 0.0
        %346 = vmatpush1.msra.mxu0 0.0
        %347 = vmatprep.subr.mxu0 0.0
        %348 = vmatpush1.msra.mxu0 0.0
        %349 = vmatprep.subr.mxu0 0.0
        %350 = vmatpush1.msra.mxu0 0.0
        %351 = vmatprep.subr.mxu0 0.0
        %352 = vmatpush1.msra.mxu0 0.0
        %353 = vmatprep.subr.mxu0 0.0
        %354 = vmatpush1.msra.mxu0 0.0
        %355 = vmatprep.subr.mxu0 0.0
        %356 = vmatpush1.msra.mxu0 0.0
        %357 = vmatprep.subr.mxu0 0.0
        %358 = vmatpush1.msra.mxu0 0.0
        %359 = vmatprep.subr.mxu0 0.0
        %360 = vmatpush1.msra.mxu0 %v281
        %361 = vmatprep.subr.mxu0 0.0
        %362 = vmatpush1.msra.mxu0 %v280
        %363 = vmatprep.subr.mxu0 0.0
        %364 = vmatpush2.msra.mxu0 0.0
        %365 = vmatprep.subr.mxu0 0.0
        %366 = vmatpush2.msra.mxu0 0.0
        %367 = vmatprep.subr.mxu0 0.0
        %368 = vmatpush2.msra.mxu0 0.0
        %369 = vmatprep.subr.mxu0 0.0
        %370 = vmatpush2.msra.mxu0 0.0
        %371 = vmatprep.subr.mxu0 0.0
        %372 = vmatpush2.msra.mxu0 0.0
        %373 = vmatprep.subr.mxu0 0.0
        %374 = vmatpush2.msra.mxu0 0.0
        %375 = vmatprep.subr.mxu0 0.0
        %376 = vmatpush2.msra.mxu0 0.0
        %377 = vmatprep.subr.mxu0 0.0
        %378 = vmatpush2.msra.mxu0 0.0
        %379 = vmatprep.subr.mxu0 0.0
        %380 = vmatpush2.msra.mxu0 0.0
        %381 = vmatprep.subr.mxu0 0.0
        %382 = vmatpush2.msra.mxu0 0.0
        %383 = vmatprep.subr.mxu0 0.0
        %384 = vmatpush2.msra.mxu0 0.0
        %385 = vmatprep.subr.mxu0 0.0
        %386 = vmatpush2.msra.mxu0 0.0
        %387 = vmatprep.subr.mxu0 0.0
        %388 = vmatpush2.msra.mxu0 0.0
        %389 = vmatprep.subr.mxu0 0.0
        %390 = vmatpush2.msra.mxu0 0.0
        %391 = vmatprep.subr.mxu0 0.0
        %392 = vmatpush2.msra.mxu0 0.0
        %393 = vmatprep.subr.mxu0 0.0
        %394 = vmatpush2.msra.mxu0 0.0
        %395 = vmatprep.mubr.f32.mxu0 0.0
        %396 = vmatmul.mubr.f32.gmra.mxu0 %v308
        %v397 = vpop.f32.mrf.mxu0
        %v398 = vadd.f32 0.0, %v397
        %v399 = vpop.f32.mrf.mxu0
        %400 = vmatprep.mubr.f32.mxu0 0.0
        %401 = vmatmul.mubr.f32.gmra.mxu0 %v311
        %v402 = vpop.f32.mrf.mxu0
        %v403 = vadd.f32 0.0, %v402
        %v404 = vpop.f32.mrf.mxu0
        %405 = vmatprep.mubr.f32.mxu0 0.0
        %406 = vmatmul.mubr.f32.gmra.mxu0 %v314
        %v407 = vpop.f32.mrf.mxu0
        %v408 = vadd.f32 0.0, %v407
        %v409 = vpop.f32.mrf.mxu0
        %410 = vmatprep.mubr.f32.mxu0 0.0
        %411 = vmatmul.mubr.f32.gmra.mxu0 %v317
        %v412 = vpop.f32.mrf.mxu0
        %v413 = vadd.f32 0.0, %v412
        %v414 = vpop.f32.mrf.mxu0
        %415 = vmatprep.mubr.f32.mxu0 0.0
        %416 = vmatmul.mubr.f32.gmra.mxu0 %v320
        %v417 = vpop.f32.mrf.mxu0
        %v418 = vadd.f32 0.0, %v417
        %v419 = vpop.f32.mrf.mxu0
        %420 = vmatprep.mubr.f32.mxu0 0.0
        %421 = vmatmul.mubr.f32.gmra.mxu0 %v323
        %v422 = vpop.f32.mrf.mxu0
        %v423 = vadd.f32 0.0, %v422
        %v424 = vpop.f32.mrf.mxu0
        %425 = vmatprep.mubr.f32.mxu0 0.0
        %426 = vmatmul.mubr.f32.gmra.mxu0 %v326
        %v427 = vpop.f32.mrf.mxu0
        %v428 = vadd.f32 0.0, %v427
        %v429 = vpop.f32.mrf.mxu0
        %430 = vmatprep.mubr.f32.mxu0 0.0
        %431 = vmatmul.mubr.f32.gmra.mxu0 %v329
        %v432 = vpop.f32.mrf.mxu0
        %v433 = vadd.f32 0.0, %v432
        %v434 = vpop.f32.mrf.mxu0
        %435 = vdwg.mxu0
        %v436 = vmul.f32 %v398, 0.0010283801
        %v437 = vmul.f32 %v408, 0.0010283801
        %v438 = vmul.f32 %v418, 0.0010283801
        %v439 = vmul.f32 %v428, 0.0010283801
        %v440 = vmul.f32 %v398, 0.007598758
        %v441 = vmul.f32 %v408, 0.007598758
        %v442 = vmul.f32 %v418, 0.007598758
        %v443 = vmul.f32 %v428, 0.007598758
        %v448 = vrot.slane %v440, 1
        %v449 = vrot.slane %v441, 1
        %v450 = vrot.slane %v442, 1
        %v451 = vrot.slane %v443, 1
        %v456 = vadd.f32 %v436, %v448
        %v457 = vadd.f32 %v437, %v449
        %v458 = vadd.f32 %v438, %v450
        %v459 = vadd.f32 %v439, %v451
        %v460 = vmul.f32 %v398, 0.036000773
        %v461 = vmul.f32 %v408, 0.036000773
        %v462 = vmul.f32 %v418, 0.036000773
        %v463 = vmul.f32 %v428, 0.036000773
        %v468 = vrot.slane %v460, 2
        %v469 = vrot.slane %v461, 2
        %v470 = vrot.slane %v462, 2
        %v471 = vrot.slane %v463, 2
        %v476 = vadd.f32 %v456, %v468
        %v477 = vadd.f32 %v457, %v469
        %v478 = vadd.f32 %v458, %v470
        %v479 = vadd.f32 %v459, %v471
        %v480 = vmul.f32 %v398, 0.10936069
        %v481 = vmul.f32 %v403, 0.10936069
        %v482 = vmul.f32 %v408, 0.10936069
        %v483 = vmul.f32 %v413, 0.10936069
        %v484 = vmul.f32 %v418, 0.10936069
        %v485 = vmul.f32 %v423, 0.10936069
        %v486 = vmul.f32 %v428, 0.10936069
        %v487 = vmul.f32 %v433, 0.10936069
        %vm496 = vcmask 1044480
        %v497 = vrot.slane %v480, 3
        %v498 = vrot.slane %v481, 3
        %v499 = vsel %vm496, %v497, %v498
        %v500 = vrot.slane %v482, 3
        %v501 = vrot.slane %v483, 3
        %v502 = vsel %vm496, %v500, %v501
        %v503 = vrot.slane %v484, 3
        %v504 = vrot.slane %v485, 3
        %v505 = vsel %vm496, %v503, %v504
        %v506 = vrot.slane %v486, 3
        %v507 = vrot.slane %v487, 3
        %v508 = vsel %vm496, %v506, %v507
        %v513 = vadd.f32 %v476, %v499
        %v514 = vadd.f32 %v477, %v502
        %v515 = vadd.f32 %v478, %v505
        %v516 = vadd.f32 %v479, %v508
        %v517 = vmul.f32 %v398, 0.21300554
        %v518 = vmul.f32 %v403, 0.21300554
        %v519 = vmul.f32 %v408, 0.21300554
        %v520 = vmul.f32 %v413, 0.21300554
        %v521 = vmul.f32 %v418, 0.21300554
        %v522 = vmul.f32 %v423, 0.21300554
        %v523 = vmul.f32 %v428, 0.21300554
        %v524 = vmul.f32 %v433, 0.21300554
        %vm533 = vcmask 1043456
        %v534 = vrot.slane %v517, 4
        %v535 = vrot.slane %v518, 4
        %v536 = vsel %vm533, %v534, %v535
        %v537 = vrot.slane %v519, 4
        %v538 = vrot.slane %v520, 4
        %v539 = vsel %vm533, %v537, %v538
        %v540 = vrot.slane %v521, 4
        %v541 = vrot.slane %v522, 4
        %v542 = vsel %vm533, %v540, %v541
        %v543 = vrot.slane %v523, 4
        %v544 = vrot.slane %v524, 4
        %v545 = vsel %vm533, %v543, %v544
        %v550 = vadd.f32 %v513, %v536
        %v551 = vadd.f32 %v514, %v539
        %v552 = vadd.f32 %v515, %v542
        %v553 = vadd.f32 %v516, %v545
        %v554 = vmul.f32 %v398, 0.26601171
        %v555 = vmul.f32 %v403, 0.26601171
        %v556 = vmul.f32 %v408, 0.26601171
        %v557 = vmul.f32 %v413, 0.26601171
        %v558 = vmul.f32 %v418, 0.26601171
        %v559 = vmul.f32 %v423, 0.26601171
        %v560 = vmul.f32 %v428, 0.26601171
        %v561 = vmul.f32 %v433, 0.26601171
        %vm570 = vcmask 1042432
        %v571 = vrot.slane %v554, 5
        %v572 = vrot.slane %v555, 5
        %v573 = vsel %vm570, %v571, %v572
        %v574 = vrot.slane %v556, 5
        %v575 = vrot.slane %v557, 5
        %v576 = vsel %vm570, %v574, %v575
        %v577 = vrot.slane %v558, 5
        %v578 = vrot.slane %v559, 5
        %v579 = vsel %vm570, %v577, %v578
        %v580 = vrot.slane %v560, 5
        %v581 = vrot.slane %v561, 5
        %v582 = vsel %vm570, %v580, %v581
        %v587 = vadd.f32 %v550, %v573
        %v588 = vadd.f32 %v551, %v576
        %v589 = vadd.f32 %v552, %v579
        %v590 = vadd.f32 %v553, %v582
        %vm591 = vcmask 1041408
        %v592 = vrot.slane %v517, 6
        %v593 = vrot.slane %v518, 6
        %v594 = vsel %vm591, %v592, %v593
        %v595 = vrot.slane %v519, 6
        %v596 = vrot.slane %v520, 6
        %v597 = vsel %vm591, %v595, %v596
        %v598 = vrot.slane %v521, 6
        %v599 = vrot.slane %v522, 6
        %v600 = vsel %vm591, %v598, %v599
        %v601 = vrot.slane %v523, 6
        %v602 = vrot.slane %v524, 6
        %v603 = vsel %vm591, %v601, %v602
        %v608 = vadd.f32 %v587, %v594
        %v609 = vadd.f32 %v588, %v597
        %v610 = vadd.f32 %v589, %v600
        %v611 = vadd.f32 %v590, %v603
        %vm612 = vcmask 1040384
        %v613 = vrot.slane %v480, 7
        %v614 = vrot.slane %v481, 7
        %v615 = vsel %vm612, %v613, %v614
        %v616 = vrot.slane %v482, 7
        %v617 = vrot.slane %v483, 7
        %v618 = vsel %vm612, %v616, %v617
        %v619 = vrot.slane %v484, 7
        %v620 = vrot.slane %v485, 7
        %v621 = vsel %vm612, %v619, %v620
        %v622 = vrot.slane %v486, 7
        %v623 = vrot.slane %v487, 7
        %v624 = vsel %vm612, %v622, %v623
        %v629 = vadd.f32 %v608, %v615
        %v630 = vadd.f32 %v609, %v618
        %v631 = vadd.f32 %v610, %v621
        %v632 = vadd.f32 %v611, %v624
        %v633 = vmul.f32 %v403, 0.036000773
        %v634 = vmul.f32 %v413, 0.036000773
        %v635 = vmul.f32 %v423, 0.036000773
        %v636 = vmul.f32 %v433, 0.036000773
        %v637 = vadd.f32 %v629, %v633
        %v638 = vadd.f32 %v630, %v634
        %v639 = vadd.f32 %v631, %v635
        %v640 = vadd.f32 %v632, %v636
        %v641 = vmul.f32 %v403, 0.007598758
        %v642 = vmul.f32 %v413, 0.007598758
        %v643 = vmul.f32 %v423, 0.007598758
        %v644 = vmul.f32 %v433, 0.007598758
        %v649 = vrot.slane %v641, 1
        %v650 = vrot.slane %v642, 1
        %v651 = vrot.slane %v643, 1
        %v652 = vrot.slane %v644, 1
        %v657 = vadd.f32 %v637, %v649
        %v658 = vadd.f32 %v638, %v650
        %v659 = vadd.f32 %v639, %v651
        %v660 = vadd.f32 %v640, %v652
        %v661 = vmul.f32 %v403, 0.0010283801
        %v662 = vmul.f32 %v413, 0.0010283801
        %v663 = vmul.f32 %v423, 0.0010283801
        %v664 = vmul.f32 %v433, 0.0010283801
        %v669 = vrot.slane %v661, 2
        %v670 = vrot.slane %v662, 2
        %v671 = vrot.slane %v663, 2
        %v672 = vrot.slane %v664, 2
        %v677 = vadd.f32 %v657, %v669
        %v678 = vadd.f32 %v658, %v670
        %v679 = vadd.f32 %v659, %v671
        %v680 = vadd.f32 %v660, %v672
        %v682 = vsel %vm306, %v272, 0
        %v685 = vsel %vm306, %v273, 0
        %v688 = vsel %vm306, %v274, 0
        %v691 = vsel %vm306, %v275, 0
        %v694 = vsel %vm306, %v276, 0
        %v697 = vsel %vm306, %v277, 0
        %v700 = vsel %vm306, %v278, 0
        %v703 = vsel %vm306, %v279, 0
        %705 = vmatprep.subr.mxu0 0.0
        %706 = vmatpush1.msra.mxu0 0.0
        %707 = vmatprep.subr.mxu0 0.0
        %708 = vmatpush1.msra.mxu0 0.0
        %709 = vmatprep.subr.mxu0 0.0
        %710 = vmatpush1.msra.mxu0 0.0
        %711 = vmatprep.subr.mxu0 0.0
        %712 = vmatpush1.msra.mxu0 0.0
        %713 = vmatprep.subr.mxu0 0.0
        %714 = vmatpush1.msra.mxu0 0.0
        %715 = vmatprep.subr.mxu0 0.0
        %716 = vmatpush1.msra.mxu0 0.0
        %717 = vmatprep.subr.mxu0 0.0
        %718 = vmatpush1.msra.mxu0 0.0
        %719 = vmatprep.subr.mxu0 0.0
        %720 = vmatpush1.msra.mxu0 0.0
        %721 = vmatprep.subr.mxu0 0.0
        %722 = vmatpush1.msra.mxu0 0.0
        %723 = vmatprep.subr.mxu0 0.0
        %724 = vmatpush1.msra.mxu0 0.0
        %725 = vmatprep.subr.mxu0 0.0
        %726 = vmatpush1.msra.mxu0 0.0
        %727 = vmatprep.subr.mxu0 0.0
        %728 = vmatpush1.msra.mxu0 0.0
        %729 = vmatprep.subr.mxu0 0.0
        %730 = vmatpush1.msra.mxu0 0.0
        %731 = vmatprep.subr.mxu0 0.0
        %732 = vmatpush1.msra.mxu0 0.0
        %733 = vmatprep.subr.mxu0 0.0
        %734 = vmatpush1.msra.mxu0 %v281
        %735 = vmatprep.subr.mxu0 0.0
        %736 = vmatpush1.msra.mxu0 %v280
        %737 = vmatprep.subr.mxu0 0.0
        %738 = vmatpush2.msra.mxu0 0.0
        %739 = vmatprep.subr.mxu0 0.0
        %740 = vmatpush2.msra.mxu0 0.0
        %741 = vmatprep.subr.mxu0 0.0
        %742 = vmatpush2.msra.mxu0 0.0
        %743 = vmatprep.subr.mxu0 0.0
        %744 = vmatpush2.msra.mxu0 0.0
        %745 = vmatprep.subr.mxu0 0.0
        %746 = vmatpush2.msra.mxu0 0.0
        %747 = vmatprep.subr.mxu0 0.0
        %748 = vmatpush2.msra.mxu0 0.0
        %749 = vmatprep.subr.mxu0 0.0
        %750 = vmatpush2.msra.mxu0 0.0
        %751 = vmatprep.subr.mxu0 0.0
        %752 = vmatpush2.msra.mxu0 0.0
        %753 = vmatprep.subr.mxu0 0.0
        %754 = vmatpush2.msra.mxu0 0.0
        %755 = vmatprep.subr.mxu0 0.0
        %756 = vmatpush2.msra.mxu0 0.0
        %757 = vmatprep.subr.mxu0 0.0
        %758 = vmatpush2.msra.mxu0 0.0
        %759 = vmatprep.subr.mxu0 0.0
        %760 = vmatpush2.msra.mxu0 0.0
        %761 = vmatprep.subr.mxu0 0.0
        %762 = vmatpush2.msra.mxu0 0.0
        %763 = vmatprep.subr.mxu0 0.0
        %764 = vmatpush2.msra.mxu0 0.0
        %765 = vmatprep.subr.mxu0 0.0
        %766 = vmatpush2.msra.mxu0 0.0
        %767 = vmatprep.subr.mxu0 0.0
        %768 = vmatpush2.msra.mxu0 0.0
        %769 = vmatprep.mubr.f32.mxu0 0.0
        %770 = vmatmul.mubr.f32.gmra.mxu0 %v682
        %v771 = vpop.f32.mrf.mxu0
        %v772 = vadd.f32 0.0, %v771
        %v773 = vpop.f32.mrf.mxu0
        %774 = vmatprep.mubr.f32.mxu0 0.0
        %775 = vmatmul.mubr.f32.gmra.mxu0 %v685
        %v776 = vpop.f32.mrf.mxu0
        %v777 = vadd.f32 0.0, %v776
        %v778 = vpop.f32.mrf.mxu0
        %779 = vmatprep.mubr.f32.mxu0 0.0
        %780 = vmatmul.mubr.f32.gmra.mxu0 %v688
        %v781 = vpop.f32.mrf.mxu0
        %v782 = vadd.f32 0.0, %v781
        %v783 = vpop.f32.mrf.mxu0
        %784 = vmatprep.mubr.f32.mxu0 0.0
        %785 = vmatmul.mubr.f32.gmra.mxu0 %v691
        %v786 = vpop.f32.mrf.mxu0
        %v787 = vadd.f32 0.0, %v786
        %v788 = vpop.f32.mrf.mxu0
        %789 = vmatprep.mubr.f32.mxu0 0.0
        %790 = vmatmul.mubr.f32.gmra.mxu0 %v694
        %v791 = vpop.f32.mrf.mxu0
        %v792 = vadd.f32 0.0, %v791
        %v793 = vpop.f32.mrf.mxu0
        %794 = vmatprep.mubr.f32.mxu0 0.0
        %795 = vmatmul.mubr.f32.gmra.mxu0 %v697
        %v796 = vpop.f32.mrf.mxu0
        %v797 = vadd.f32 0.0, %v796
        %v798 = vpop.f32.mrf.mxu0
        %799 = vmatprep.mubr.f32.mxu0 0.0
        %800 = vmatmul.mubr.f32.gmra.mxu0 %v700
        %v801 = vpop.f32.mrf.mxu0
        %v802 = vadd.f32 0.0, %v801
        %v803 = vpop.f32.mrf.mxu0
        %804 = vmatprep.mubr.f32.mxu0 0.0
        %805 = vmatmul.mubr.f32.gmra.mxu0 %v703
        %v806 = vpop.f32.mrf.mxu0
        %v807 = vadd.f32 0.0, %v806
        %v808 = vpop.f32.mrf.mxu0
        %809 = vdwg.mxu0
        %v810 = vmul.f32 %v772, 0.0010283801
        %v811 = vmul.f32 %v782, 0.0010283801
        %v812 = vmul.f32 %v792, 0.0010283801
        %v813 = vmul.f32 %v802, 0.0010283801
        %v814 = vmul.f32 %v772, 0.007598758
        %v815 = vmul.f32 %v782, 0.007598758
        %v816 = vmul.f32 %v792, 0.007598758
        %v817 = vmul.f32 %v802, 0.007598758
        %v822 = vrot.slane %v814, 1
        %v823 = vrot.slane %v815, 1
        %v824 = vrot.slane %v816, 1
        %v825 = vrot.slane %v817, 1
        %v830 = vadd.f32 %v810, %v822
        %v831 = vadd.f32 %v811, %v823
        %v832 = vadd.f32 %v812, %v824
        %v833 = vadd.f32 %v813, %v825
        %v834 = vmul.f32 %v772, 0.036000773
        %v835 = vmul.f32 %v782, 0.036000773
        %v836 = vmul.f32 %v792, 0.036000773
        %v837 = vmul.f32 %v802, 0.036000773
        %v842 = vrot.slane %v834, 2
        %v843 = vrot.slane %v835, 2
        %v844 = vrot.slane %v836, 2
        %v845 = vrot.slane %v837, 2
        %v850 = vadd.f32 %v830, %v842
        %v851 = vadd.f32 %v831, %v843
        %v852 = vadd.f32 %v832, %v844
        %v853 = vadd.f32 %v833, %v845
        %v854 = vmul.f32 %v772, 0.10936069
        %v855 = vmul.f32 %v777, 0.10936069
        %v856 = vmul.f32 %v782, 0.10936069
        %v857 = vmul.f32 %v787, 0.10936069
        %v858 = vmul.f32 %v792, 0.10936069
        %v859 = vmul.f32 %v797, 0.10936069
        %v860 = vmul.f32 %v802, 0.10936069
        %v861 = vmul.f32 %v807, 0.10936069
        %v870 = vrot.slane %v854, 3
        %v871 = vrot.slane %v855, 3
        %v872 = vsel %vm496, %v870, %v871
        %v873 = vrot.slane %v856, 3
        %v874 = vrot.slane %v857, 3
        %v875 = vsel %vm496, %v873, %v874
        %v876 = vrot.slane %v858, 3
        %v877 = vrot.slane %v859, 3
        %v878 = vsel %vm496, %v876, %v877
        %v879 = vrot.slane %v860, 3
        %v880 = vrot.slane %v861, 3
        %v881 = vsel %vm496, %v879, %v880
        %v886 = vadd.f32 %v850, %v872
        %v887 = vadd.f32 %v851, %v875
        %v888 = vadd.f32 %v852, %v878
        %v889 = vadd.f32 %v853, %v881
        %v890 = vmul.f32 %v772, 0.21300554
        %v891 = vmul.f32 %v777, 0.21300554
        %v892 = vmul.f32 %v782, 0.21300554
        %v893 = vmul.f32 %v787, 0.21300554
        %v894 = vmul.f32 %v792, 0.21300554
        %v895 = vmul.f32 %v797, 0.21300554
        %v896 = vmul.f32 %v802, 0.21300554
        %v897 = vmul.f32 %v807, 0.21300554
        %v906 = vrot.slane %v890, 4
        %v907 = vrot.slane %v891, 4
        %v908 = vsel %vm533, %v906, %v907
        %v909 = vrot.slane %v892, 4
        %v910 = vrot.slane %v893, 4
        %v911 = vsel %vm533, %v909, %v910
        %v912 = vrot.slane %v894, 4
        %v913 = vrot.slane %v895, 4
        %v914 = vsel %vm533, %v912, %v913
        %v915 = vrot.slane %v896, 4
        %v916 = vrot.slane %v897, 4
        %v917 = vsel %vm533, %v915, %v916
        %v922 = vadd.f32 %v886, %v908
        %v923 = vadd.f32 %v887, %v911
        %v924 = vadd.f32 %v888, %v914
        %v925 = vadd.f32 %v889, %v917
        %v926 = vmul.f32 %v772, 0.26601171
        %v927 = vmul.f32 %v777, 0.26601171
        %v928 = vmul.f32 %v782, 0.26601171
        %v929 = vmul.f32 %v787, 0.26601171
        %v930 = vmul.f32 %v792, 0.26601171
        %v931 = vmul.f32 %v797, 0.26601171
        %v932 = vmul.f32 %v802, 0.26601171
        %v933 = vmul.f32 %v807, 0.26601171
        %v942 = vrot.slane %v926, 5
        %v943 = vrot.slane %v927, 5
        %v944 = vsel %vm570, %v942, %v943
        %v945 = vrot.slane %v928, 5
        %v946 = vrot.slane %v929, 5
        %v947 = vsel %vm570, %v945, %v946
        %v948 = vrot.slane %v930, 5
        %v949 = vrot.slane %v931, 5
        %v950 = vsel %vm570, %v948, %v949
        %v951 = vrot.slane %v932, 5
        %v952 = vrot.slane %v933, 5
        %v953 = vsel %vm570, %v951, %v952
        %v958 = vadd.f32 %v922, %v944
        %v959 = vadd.f32 %v923, %v947
        %v960 = vadd.f32 %v924, %v950
        %v961 = vadd.f32 %v925, %v953
        %v962 = vrot.slane %v890, 6
        %v963 = vrot.slane %v891, 6
        %v964 = vsel %vm591, %v962, %v963
        %v965 = vrot.slane %v892, 6
        %v966 = vrot.slane %v893, 6
        %v967 = vsel %vm591, %v965, %v966
        %v968 = vrot.slane %v894, 6
        %v969 = vrot.slane %v895, 6
        %v970 = vsel %vm591, %v968, %v969
        %v971 = vrot.slane %v896, 6
        %v972 = vrot.slane %v897, 6
        %v973 = vsel %vm591, %v971, %v972
        %v978 = vadd.f32 %v958, %v964
        %v979 = vadd.f32 %v959, %v967
        %v980 = vadd.f32 %v960, %v970
        %v981 = vadd.f32 %v961, %v973
        %v982 = vrot.slane %v854, 7
        %v983 = vrot.slane %v855, 7
        %v984 = vsel %vm612, %v982, %v983
        %v985 = vrot.slane %v856, 7
        %v986 = vrot.slane %v857, 7
        %v987 = vsel %vm612, %v985, %v986
        %v988 = vrot.slane %v858, 7
        %v989 = vrot.slane %v859, 7
        %v990 = vsel %vm612, %v988, %v989
        %v991 = vrot.slane %v860, 7
        %v992 = vrot.slane %v861, 7
        %v993 = vsel %vm612, %v991, %v992
        %v998 = vadd.f32 %v978, %v984
        %v999 = vadd.f32 %v979, %v987
        %v1000 = vadd.f32 %v980, %v990
        %v1001 = vadd.f32 %v981, %v993
        %v1002 = vmul.f32 %v777, 0.036000773
        %v1003 = vmul.f32 %v787, 0.036000773
        %v1004 = vmul.f32 %v797, 0.036000773
        %v1005 = vmul.f32 %v807, 0.036000773
        %v1006 = vadd.f32 %v998, %v1002
        %v1007 = vadd.f32 %v999, %v1003
        %v1008 = vadd.f32 %v1000, %v1004
        %v1009 = vadd.f32 %v1001, %v1005
        %v1010 = vmul.f32 %v777, 0.007598758
        %v1011 = vmul.f32 %v787, 0.007598758
        %v1012 = vmul.f32 %v797, 0.007598758
        %v1013 = vmul.f32 %v807, 0.007598758
        %v1018 = vrot.slane %v1010, 1
        %v1019 = vrot.slane %v1011, 1
        %v1020 = vrot.slane %v1012, 1
        %v1021 = vrot.slane %v1013, 1
        %v1026 = vadd.f32 %v1006, %v1018
        %v1027 = vadd.f32 %v1007, %v1019
        %v1028 = vadd.f32 %v1008, %v1020
        %v1029 = vadd.f32 %v1009, %v1021
        %v1030 = vmul.f32 %v777, 0.0010283801
        %v1031 = vmul.f32 %v787, 0.0010283801
        %v1032 = vmul.f32 %v797, 0.0010283801
        %v1033 = vmul.f32 %v807, 0.0010283801
        %v1038 = vrot.slane %v1030, 2
        %v1039 = vrot.slane %v1031, 2
        %v1040 = vrot.slane %v1032, 2
        %v1041 = vrot.slane %v1033, 2
        %v1046 = vadd.f32 %v1026, %v1038
        %v1047 = vadd.f32 %v1027, %v1039
        %v1048 = vadd.f32 %v1028, %v1040
        %v1049 = vadd.f32 %v1029, %v1041
        %v1051 = vsel %vm306, %v282, 0
        %v1054 = vsel %vm306, %v283, 0
        %v1057 = vsel %vm306, %v284, 0
        %v1060 = vsel %vm306, %v285, 0
        %v1063 = vsel %vm306, %v286, 0
        %v1066 = vsel %vm306, %v287, 0
        %v1069 = vsel %vm306, %v288, 0
        %v1072 = vsel %vm306, %v289, 0
        %1074 = vmatprep.subr.mxu0 0.0
        %1075 = vmatpush1.msra.mxu0 0.0
        %1076 = vmatprep.subr.mxu0 0.0
        %1077 = vmatpush1.msra.mxu0 0.0
        %1078 = vmatprep.subr.mxu0 0.0
        %1079 = vmatpush1.msra.mxu0 0.0
        %1080 = vmatprep.subr.mxu0 0.0
        %1081 = vmatpush1.msra.mxu0 0.0
        %1082 = vmatprep.subr.mxu0 0.0
        %1083 = vmatpush1.msra.mxu0 0.0
        %1084 = vmatprep.subr.mxu0 0.0
        %1085 = vmatpush1.msra.mxu0 0.0
        %1086 = vmatprep.subr.mxu0 0.0
        %1087 = vmatpush1.msra.mxu0 0.0
        %1088 = vmatprep.subr.mxu0 0.0
        %1089 = vmatpush1.msra.mxu0 0.0
        %1090 = vmatprep.subr.mxu0 0.0
        %1091 = vmatpush1.msra.mxu0 0.0
        %1092 = vmatprep.subr.mxu0 0.0
        %1093 = vmatpush1.msra.mxu0 0.0
        %1094 = vmatprep.subr.mxu0 0.0
        %1095 = vmatpush1.msra.mxu0 0.0
        %1096 = vmatprep.subr.mxu0 0.0
        %1097 = vmatpush1.msra.mxu0 0.0
        %1098 = vmatprep.subr.mxu0 0.0
        %1099 = vmatpush1.msra.mxu0 0.0
        %1100 = vmatprep.subr.mxu0 0.0
        %1101 = vmatpush1.msra.mxu0 0.0
        %1102 = vmatprep.subr.mxu0 0.0
        %1103 = vmatpush1.msra.mxu0 %v281
        %1104 = vmatprep.subr.mxu0 0.0
        %1105 = vmatpush1.msra.mxu0 %v280
        %1106 = vmatprep.subr.mxu0 0.0
        %1107 = vmatpush2.msra.mxu0 0.0
        %1108 = vmatprep.subr.mxu0 0.0
        %1109 = vmatpush2.msra.mxu0 0.0
        %1110 = vmatprep.subr.mxu0 0.0
        %1111 = vmatpush2.msra.mxu0 0.0
        %1112 = vmatprep.subr.mxu0 0.0
        %1113 = vmatpush2.msra.mxu0 0.0
        %1114 = vmatprep.subr.mxu0 0.0
        %1115 = vmatpush2.msra.mxu0 0.0
        %1116 = vmatprep.subr.mxu0 0.0
        %1117 = vmatpush2.msra.mxu0 0.0
        %1118 = vmatprep.subr.mxu0 0.0
        %1119 = vmatpush2.msra.mxu0 0.0
        %1120 = vmatprep.subr.mxu0 0.0
        %1121 = vmatpush2.msra.mxu0 0.0
        %1122 = vmatprep.subr.mxu0 0.0
        %1123 = vmatpush2.msra.mxu0 0.0
        %1124 = vmatprep.subr.mxu0 0.0
        %1125 = vmatpush2.msra.mxu0 0.0
        %1126 = vmatprep.subr.mxu0 0.0
        %1127 = vmatpush2.msra.mxu0 0.0
        %1128 = vmatprep.subr.mxu0 0.0
        %1129 = vmatpush2.msra.mxu0 0.0
        %1130 = vmatprep.subr.mxu0 0.0
        %1131 = vmatpush2.msra.mxu0 0.0
        %1132 = vmatprep.subr.mxu0 0.0
        %1133 = vmatpush2.msra.mxu0 0.0
        %1134 = vmatprep.subr.mxu0 0.0
        %1135 = vmatpush2.msra.mxu0 0.0
        %1136 = vmatprep.subr.mxu0 0.0
        %1137 = vmatpush2.msra.mxu0 0.0
        %1138 = vmatprep.mubr.f32.mxu0 0.0
        %1139 = vmatmul.mubr.f32.gmra.mxu0 %v1051
        %v1140 = vpop.f32.mrf.mxu0
        %v1141 = vadd.f32 0.0, %v1140
        %v1142 = vpop.f32.mrf.mxu0
        %1143 = vmatprep.mubr.f32.mxu0 0.0
        %1144 = vmatmul.mubr.f32.gmra.mxu0 %v1054
        %v1145 = vpop.f32.mrf.mxu0
        %v1146 = vadd.f32 0.0, %v1145
        %v1147 = vpop.f32.mrf.mxu0
        %1148 = vmatprep.mubr.f32.mxu0 0.0
        %1149 = vmatmul.mubr.f32.gmra.mxu0 %v1057
        %v1150 = vpop.f32.mrf.mxu0
        %v1151 = vadd.f32 0.0, %v1150
        %v1152 = vpop.f32.mrf.mxu0
        %1153 = vmatprep.mubr.f32.mxu0 0.0
        %1154 = vmatmul.mubr.f32.gmra.mxu0 %v1060
        %v1155 = vpop.f32.mrf.mxu0
        %v1156 = vadd.f32 0.0, %v1155
        %v1157 = vpop.f32.mrf.mxu0
        %1158 = vmatprep.mubr.f32.mxu0 0.0
        %1159 = vmatmul.mubr.f32.gmra.mxu0 %v1063
        %v1160 = vpop.f32.mrf.mxu0
        %v1161 = vadd.f32 0.0, %v1160
        %v1162 = vpop.f32.mrf.mxu0
        %1163 = vmatprep.mubr.f32.mxu0 0.0
        %1164 = vmatmul.mubr.f32.gmra.mxu0 %v1066
        %v1165 = vpop.f32.mrf.mxu0
        %v1166 = vadd.f32 0.0, %v1165
        %v1167 = vpop.f32.mrf.mxu0
        %1168 = vmatprep.mubr.f32.mxu0 0.0
        %1169 = vmatmul.mubr.f32.gmra.mxu0 %v1069
        %v1170 = vpop.f32.mrf.mxu0
        %v1171 = vadd.f32 0.0, %v1170
        %v1172 = vpop.f32.mrf.mxu0
        %1173 = vmatprep.mubr.f32.mxu0 0.0
        %1174 = vmatmul.mubr.f32.gmra.mxu0 %v1072
        %v1175 = vpop.f32.mrf.mxu0
        %v1176 = vadd.f32 0.0, %v1175
        %v1177 = vpop.f32.mrf.mxu0
        %1178 = vdwg.mxu0
        %v1179 = vmul.f32 %v1141, 0.0010283801
        %v1180 = vmul.f32 %v1151, 0.0010283801
        %v1181 = vmul.f32 %v1161, 0.0010283801
        %v1182 = vmul.f32 %v1171, 0.0010283801
        %v1183 = vmul.f32 %v1141, 0.007598758
        %v1184 = vmul.f32 %v1151, 0.007598758
        %v1185 = vmul.f32 %v1161, 0.007598758
        %v1186 = vmul.f32 %v1171, 0.007598758
        %v1191 = vrot.slane %v1183, 1
        %v1192 = vrot.slane %v1184, 1
        %v1193 = vrot.slane %v1185, 1
        %v1194 = vrot.slane %v1186, 1
        %v1199 = vadd.f32 %v1179, %v1191
        %v1200 = vadd.f32 %v1180, %v1192
        %v1201 = vadd.f32 %v1181, %v1193
        %v1202 = vadd.f32 %v1182, %v1194
        %v1203 = vmul.f32 %v1141, 0.036000773
        %v1204 = vmul.f32 %v1151, 0.036000773
        %v1205 = vmul.f32 %v1161, 0.036000773
        %v1206 = vmul.f32 %v1171, 0.036000773
        %v1211 = vrot.slane %v1203, 2
        %v1212 = vrot.slane %v1204, 2
        %v1213 = vrot.slane %v1205, 2
        %v1214 = vrot.slane %v1206, 2
        %v1219 = vadd.f32 %v1199, %v1211
        %v1220 = vadd.f32 %v1200, %v1212
        %v1221 = vadd.f32 %v1201, %v1213
        %v1222 = vadd.f32 %v1202, %v1214
        %v1223 = vmul.f32 %v1141, 0.10936069
        %v1224 = vmul.f32 %v1146, 0.10936069
        %v1225 = vmul.f32 %v1151, 0.10936069
        %v1226 = vmul.f32 %v1156, 0.10936069
        %v1227 = vmul.f32 %v1161, 0.10936069
        %v1228 = vmul.f32 %v1166, 0.10936069
        %v1229 = vmul.f32 %v1171, 0.10936069
        %v1230 = vmul.f32 %v1176, 0.10936069
        %v1239 = vrot.slane %v1223, 3
        %v1240 = vrot.slane %v1224, 3
        %v1241 = vsel %vm496, %v1239, %v1240
        %v1242 = vrot.slane %v1225, 3
        %v1243 = vrot.slane %v1226, 3
        %v1244 = vsel %vm496, %v1242, %v1243
        %v1245 = vrot.slane %v1227, 3
        %v1246 = vrot.slane %v1228, 3
        %v1247 = vsel %vm496, %v1245, %v1246
        %v1248 = vrot.slane %v1229, 3
        %v1249 = vrot.slane %v1230, 3
        %v1250 = vsel %vm496, %v1248, %v1249
        %v1255 = vadd.f32 %v1219, %v1241
        %v1256 = vadd.f32 %v1220, %v1244
        %v1257 = vadd.f32 %v1221, %v1247
        %v1258 = vadd.f32 %v1222, %v1250
        %v1259 = vmul.f32 %v1141, 0.21300554
        %v1260 = vmul.f32 %v1146, 0.21300554
        %v1261 = vmul.f32 %v1151, 0.21300554
        %v1262 = vmul.f32 %v1156, 0.21300554
        %v1263 = vmul.f32 %v1161, 0.21300554
        %v1264 = vmul.f32 %v1166, 0.21300554
        %v1265 = vmul.f32 %v1171, 0.21300554
        %v1266 = vmul.f32 %v1176, 0.21300554
        %v1275 = vrot.slane %v1259, 4
        %v1276 = vrot.slane %v1260, 4
        %v1277 = vsel %vm533, %v1275, %v1276
        %v1278 = vrot.slane %v1261, 4
        %v1279 = vrot.slane %v1262, 4
        %v1280 = vsel %vm533, %v1278, %v1279
        %v1281 = vrot.slane %v1263, 4
        %v1282 = vrot.slane %v1264, 4
        %v1283 = vsel %vm533, %v1281, %v1282
        %v1284 = vrot.slane %v1265, 4
        %v1285 = vrot.slane %v1266, 4
        %v1286 = vsel %vm533, %v1284, %v1285
        %v1291 = vadd.f32 %v1255, %v1277
        %v1292 = vadd.f32 %v1256, %v1280
        %v1293 = vadd.f32 %v1257, %v1283
        %v1294 = vadd.f32 %v1258, %v1286
        %v1295 = vmul.f32 %v1141, 0.26601171
        %v1296 = vmul.f32 %v1146, 0.26601171
        %v1297 = vmul.f32 %v1151, 0.26601171
        %v1298 = vmul.f32 %v1156, 0.26601171
        %v1299 = vmul.f32 %v1161, 0.26601171
        %v1300 = vmul.f32 %v1166, 0.26601171
        %v1301 = vmul.f32 %v1171, 0.26601171
        %v1302 = vmul.f32 %v1176, 0.26601171
        %v1311 = vrot.slane %v1295, 5
        %v1312 = vrot.slane %v1296, 5
        %v1313 = vsel %vm570, %v1311, %v1312
        %v1314 = vrot.slane %v1297, 5
        %v1315 = vrot.slane %v1298, 5
        %v1316 = vsel %vm570, %v1314, %v1315
        %v1317 = vrot.slane %v1299, 5
        %v1318 = vrot.slane %v1300, 5
        %v1319 = vsel %vm570, %v1317, %v1318
        %v1320 = vrot.slane %v1301, 5
        %v1321 = vrot.slane %v1302, 5
        %v1322 = vsel %vm570, %v1320, %v1321
        %v1327 = vadd.f32 %v1291, %v1313
        %v1328 = vadd.f32 %v1292, %v1316
        %v1329 = vadd.f32 %v1293, %v1319
        %v1330 = vadd.f32 %v1294, %v1322
        %v1331 = vrot.slane %v1259, 6
        %v1332 = vrot.slane %v1260, 6
        %v1333 = vsel %vm591, %v1331, %v1332
        %v1334 = vrot.slane %v1261, 6
        %v1335 = vrot.slane %v1262, 6
        %v1336 = vsel %vm591, %v1334, %v1335
        %v1337 = vrot.slane %v1263, 6
        %v1338 = vrot.slane %v1264, 6
        %v1339 = vsel %vm591, %v1337, %v1338
        %v1340 = vrot.slane %v1265, 6
        %v1341 = vrot.slane %v1266, 6
        %v1342 = vsel %vm591, %v1340, %v1341
        %v1347 = vadd.f32 %v1327, %v1333
        %v1348 = vadd.f32 %v1328, %v1336
        %v1349 = vadd.f32 %v1329, %v1339
        %v1350 = vadd.f32 %v1330, %v1342
        %v1351 = vrot.slane %v1223, 7
        %v1352 = vrot.slane %v1224, 7
        %v1353 = vsel %vm612, %v1351, %v1352
        %v1354 = vrot.slane %v1225, 7
        %v1355 = vrot.slane %v1226, 7
        %v1356 = vsel %vm612, %v1354, %v1355
        %v1357 = vrot.slane %v1227, 7
        %v1358 = vrot.slane %v1228, 7
        %v1359 = vsel %vm612, %v1357, %v1358
        %v1360 = vrot.slane %v1229, 7
        %v1361 = vrot.slane %v1230, 7
        %v1362 = vsel %vm612, %v1360, %v1361
        %v1367 = vadd.f32 %v1347, %v1353
        %v1368 = vadd.f32 %v1348, %v1356
        %v1369 = vadd.f32 %v1349, %v1359
        %v1370 = vadd.f32 %v1350, %v1362
        %v1371 = vmul.f32 %v1146, 0.036000773
        %v1372 = vmul.f32 %v1156, 0.036000773
        %v1373 = vmul.f32 %v1166, 0.036000773
        %v1374 = vmul.f32 %v1176, 0.036000773
        %v1375 = vadd.f32 %v1367, %v1371
        %v1376 = vadd.f32 %v1368, %v1372
        %v1377 = vadd.f32 %v1369, %v1373
        %v1378 = vadd.f32 %v1370, %v1374
        %v1379 = vmul.f32 %v1146, 0.007598758
        %v1380 = vmul.f32 %v1156, 0.007598758
        %v1381 = vmul.f32 %v1166, 0.007598758
        %v1382 = vmul.f32 %v1176, 0.007598758
        %v1387 = vrot.slane %v1379, 1
        %v1388 = vrot.slane %v1380, 1
        %v1389 = vrot.slane %v1381, 1
        %v1390 = vrot.slane %v1382, 1
        %v1395 = vadd.f32 %v1375, %v1387
        %v1396 = vadd.f32 %v1376, %v1388
        %v1397 = vadd.f32 %v1377, %v1389
        %v1398 = vadd.f32 %v1378, %v1390
        %v1399 = vmul.f32 %v1146, 0.0010283801
        %v1400 = vmul.f32 %v1156, 0.0010283801
        %v1401 = vmul.f32 %v1166, 0.0010283801
        %v1402 = vmul.f32 %v1176, 0.0010283801
        %v1407 = vrot.slane %v1399, 2
        %v1408 = vrot.slane %v1400, 2
        %v1409 = vrot.slane %v1401, 2
        %v1410 = vrot.slane %v1402, 2
        %v1415 = vadd.f32 %v1395, %v1407
        %v1416 = vadd.f32 %v1396, %v1408
        %v1417 = vadd.f32 %v1397, %v1409
        %v1418 = vadd.f32 %v1398, %v1410
        %v1420 = vsel %vm306, %v290, 0
        %v1423 = vsel %vm306, %v291, 0
        %v1426 = vsel %vm306, %v292, 0
        %v1429 = vsel %vm306, %v293, 0
        %v1432 = vsel %vm306, %v294, 0
        %v1435 = vsel %vm306, %v295, 0
        %v1438 = vsel %vm306, %v296, 0
        %v1441 = vsel %vm306, %v297, 0
        %1443 = vmatprep.subr.mxu0 0.0
        %1444 = vmatpush1.msra.mxu0 0.0
        %1445 = vmatprep.subr.mxu0 0.0
        %1446 = vmatpush1.msra.mxu0 0.0
        %1447 = vmatprep.subr.mxu0 0.0
        %1448 = vmatpush1.msra.mxu0 0.0
        %1449 = vmatprep.subr.mxu0 0.0
        %1450 = vmatpush1.msra.mxu0 0.0
        %1451 = vmatprep.subr.mxu0 0.0
        %1452 = vmatpush1.msra.mxu0 0.0
        %1453 = vmatprep.subr.mxu0 0.0
        %1454 = vmatpush1.msra.mxu0 0.0
        %1455 = vmatprep.subr.mxu0 0.0
        %1456 = vmatpush1.msra.mxu0 0.0
        %1457 = vmatprep.subr.mxu0 0.0
        %1458 = vmatpush1.msra.mxu0 0.0
        %1459 = vmatprep.subr.mxu0 0.0
        %1460 = vmatpush1.msra.mxu0 0.0
        %1461 = vmatprep.subr.mxu0 0.0
        %1462 = vmatpush1.msra.mxu0 0.0
        %1463 = vmatprep.subr.mxu0 0.0
        %1464 = vmatpush1.msra.mxu0 0.0
        %1465 = vmatprep.subr.mxu0 0.0
        %1466 = vmatpush1.msra.mxu0 0.0
        %1467 = vmatprep.subr.mxu0 0.0
        %1468 = vmatpush1.msra.mxu0 0.0
        %1469 = vmatprep.subr.mxu0 0.0
        %1470 = vmatpush1.msra.mxu0 0.0
        %1471 = vmatprep.subr.mxu0 0.0
        %1472 = vmatpush1.msra.mxu0 %v281
        %1473 = vmatprep.subr.mxu0 0.0
        %1474 = vmatpush1.msra.mxu0 %v280
        %1475 = vmatprep.subr.mxu0 0.0
        %1476 = vmatpush2.msra.mxu0 0.0
        %1477 = vmatprep.subr.mxu0 0.0
        %1478 = vmatpush2.msra.mxu0 0.0
        %1479 = vmatprep.subr.mxu0 0.0
        %1480 = vmatpush2.msra.mxu0 0.0
        %1481 = vmatprep.subr.mxu0 0.0
        %1482 = vmatpush2.msra.mxu0 0.0
        %1483 = vmatprep.subr.mxu0 0.0
        %1484 = vmatpush2.msra.mxu0 0.0
        %1485 = vmatprep.subr.mxu0 0.0
        %1486 = vmatpush2.msra.mxu0 0.0
        %1487 = vmatprep.subr.mxu0 0.0
        %1488 = vmatpush2.msra.mxu0 0.0
        %1489 = vmatprep.subr.mxu0 0.0
        %1490 = vmatpush2.msra.mxu0 0.0
        %1491 = vmatprep.subr.mxu0 0.0
        %1492 = vmatpush2.msra.mxu0 0.0
        %1493 = vmatprep.subr.mxu0 0.0
        %1494 = vmatpush2.msra.mxu0 0.0
        %1495 = vmatprep.subr.mxu0 0.0
        %1496 = vmatpush2.msra.mxu0 0.0
        %1497 = vmatprep.subr.mxu0 0.0
        %1498 = vmatpush2.msra.mxu0 0.0
        %1499 = vmatprep.subr.mxu0 0.0
        %1500 = vmatpush2.msra.mxu0 0.0
        %1501 = vmatprep.subr.mxu0 0.0
        %1502 = vmatpush2.msra.mxu0 0.0
        %1503 = vmatprep.subr.mxu0 0.0
        %1504 = vmatpush2.msra.mxu0 0.0
        %1505 = vmatprep.subr.mxu0 0.0
        %1506 = vmatpush2.msra.mxu0 0.0
        %1507 = vmatprep.mubr.f32.mxu0 0.0
        %1508 = vmatmul.mubr.f32.gmra.mxu0 %v1420
        %v1509 = vpop.f32.mrf.mxu0
        %v1510 = vadd.f32 0.0, %v1509
        %v1511 = vpop.f32.mrf.mxu0
        %1512 = vmatprep.mubr.f32.mxu0 0.0
        %1513 = vmatmul.mubr.f32.gmra.mxu0 %v1423
        %v1514 = vpop.f32.mrf.mxu0
        %v1515 = vadd.f32 0.0, %v1514
        %v1516 = vpop.f32.mrf.mxu0
        %1517 = vmatprep.mubr.f32.mxu0 0.0
        %1518 = vmatmul.mubr.f32.gmra.mxu0 %v1426
        %v1519 = vpop.f32.mrf.mxu0
        %v1520 = vadd.f32 0.0, %v1519
        %v1521 = vpop.f32.mrf.mxu0
        %1522 = vmatprep.mubr.f32.mxu0 0.0
        %1523 = vmatmul.mubr.f32.gmra.mxu0 %v1429
        %v1524 = vpop.f32.mrf.mxu0
        %v1525 = vadd.f32 0.0, %v1524
        %v1526 = vpop.f32.mrf.mxu0
        %1527 = vmatprep.mubr.f32.mxu0 0.0
        %1528 = vmatmul.mubr.f32.gmra.mxu0 %v1432
        %v1529 = vpop.f32.mrf.mxu0
        %v1530 = vadd.f32 0.0, %v1529
        %v1531 = vpop.f32.mrf.mxu0
        %1532 = vmatprep.mubr.f32.mxu0 0.0
        %1533 = vmatmul.mubr.f32.gmra.mxu0 %v1435
        %v1534 = vpop.f32.mrf.mxu0
        %v1535 = vadd.f32 0.0, %v1534
        %v1536 = vpop.f32.mrf.mxu0
        %1537 = vmatprep.mubr.f32.mxu0 0.0
        %1538 = vmatmul.mubr.f32.gmra.mxu0 %v1438
        %v1539 = vpop.f32.mrf.mxu0
        %v1540 = vadd.f32 0.0, %v1539
        %v1541 = vpop.f32.mrf.mxu0
        %1542 = vmatprep.mubr.f32.mxu0 0.0
        %1543 = vmatmul.mubr.f32.gmra.mxu0 %v1441
        %v1544 = vpop.f32.mrf.mxu0
        %v1545 = vadd.f32 0.0, %v1544
        %v1546 = vpop.f32.mrf.mxu0
        %1547 = vdwg.mxu0
        %v1548 = vmul.f32 %v1510, 0.0010283801
        %v1549 = vmul.f32 %v1520, 0.0010283801
        %v1550 = vmul.f32 %v1530, 0.0010283801
        %v1551 = vmul.f32 %v1540, 0.0010283801
        %v1552 = vmul.f32 %v1510, 0.007598758
        %v1553 = vmul.f32 %v1520, 0.007598758
        %v1554 = vmul.f32 %v1530, 0.007598758
        %v1555 = vmul.f32 %v1540, 0.007598758
        %v1560 = vrot.slane %v1552, 1
        %v1561 = vrot.slane %v1553, 1
        %v1562 = vrot.slane %v1554, 1
        %v1563 = vrot.slane %v1555, 1
        %v1568 = vadd.f32 %v1548, %v1560
        %v1569 = vadd.f32 %v1549, %v1561
        %v1570 = vadd.f32 %v1550, %v1562
        %v1571 = vadd.f32 %v1551, %v1563
        %v1572 = vmul.f32 %v1510, 0.036000773
        %v1573 = vmul.f32 %v1520, 0.036000773
        %v1574 = vmul.f32 %v1530, 0.036000773
        %v1575 = vmul.f32 %v1540, 0.036000773
        %v1580 = vrot.slane %v1572, 2
        %v1581 = vrot.slane %v1573, 2
        %v1582 = vrot.slane %v1574, 2
        %v1583 = vrot.slane %v1575, 2
        %v1588 = vadd.f32 %v1568, %v1580
        %v1589 = vadd.f32 %v1569, %v1581
        %v1590 = vadd.f32 %v1570, %v1582
        %v1591 = vadd.f32 %v1571, %v1583
        %v1592 = vmul.f32 %v1510, 0.10936069
        %v1593 = vmul.f32 %v1515, 0.10936069
        %v1594 = vmul.f32 %v1520, 0.10936069
        %v1595 = vmul.f32 %v1525, 0.10936069
        %v1596 = vmul.f32 %v1530, 0.10936069
        %v1597 = vmul.f32 %v1535, 0.10936069
        %v1598 = vmul.f32 %v1540, 0.10936069
        %v1599 = vmul.f32 %v1545, 0.10936069
        %v1608 = vrot.slane %v1592, 3
        %v1609 = vrot.slane %v1593, 3
        %v1610 = vsel %vm496, %v1608, %v1609
        %v1611 = vrot.slane %v1594, 3
        %v1612 = vrot.slane %v1595, 3
        %v1613 = vsel %vm496, %v1611, %v1612
        %v1614 = vrot.slane %v1596, 3
        %v1615 = vrot.slane %v1597, 3
        %v1616 = vsel %vm496, %v1614, %v1615
        %v1617 = vrot.slane %v1598, 3
        %v1618 = vrot.slane %v1599, 3
        %v1619 = vsel %vm496, %v1617, %v1618
        %v1624 = vadd.f32 %v1588, %v1610
        %v1625 = vadd.f32 %v1589, %v1613
        %v1626 = vadd.f32 %v1590, %v1616
        %v1627 = vadd.f32 %v1591, %v1619
        %v1628 = vmul.f32 %v1510, 0.21300554
        %v1629 = vmul.f32 %v1515, 0.21300554
        %v1630 = vmul.f32 %v1520, 0.21300554
        %v1631 = vmul.f32 %v1525, 0.21300554
        %v1632 = vmul.f32 %v1530, 0.21300554
        %v1633 = vmul.f32 %v1535, 0.21300554
        %v1634 = vmul.f32 %v1540, 0.21300554
        %v1635 = vmul.f32 %v1545, 0.21300554
        %v1644 = vrot.slane %v1628, 4
        %v1645 = vrot.slane %v1629, 4
        %v1646 = vsel %vm533, %v1644, %v1645
        %v1647 = vrot.slane %v1630, 4
        %v1648 = vrot.slane %v1631, 4
        %v1649 = vsel %vm533, %v1647, %v1648
        %v1650 = vrot.slane %v1632, 4
        %v1651 = vrot.slane %v1633, 4
        %v1652 = vsel %vm533, %v1650, %v1651
        %v1653 = vrot.slane %v1634, 4
        %v1654 = vrot.slane %v1635, 4
        %v1655 = vsel %vm533, %v1653, %v1654
        %v1660 = vadd.f32 %v1624, %v1646
        %v1661 = vadd.f32 %v1625, %v1649
        %v1662 = vadd.f32 %v1626, %v1652
        %v1663 = vadd.f32 %v1627, %v1655
        %v1664 = vmul.f32 %v1510, 0.26601171
        %v1665 = vmul.f32 %v1515, 0.26601171
        %v1666 = vmul.f32 %v1520, 0.26601171
        %v1667 = vmul.f32 %v1525, 0.26601171
        %v1668 = vmul.f32 %v1530, 0.26601171
        %v1669 = vmul.f32 %v1535, 0.26601171
        %v1670 = vmul.f32 %v1540, 0.26601171
        %v1671 = vmul.f32 %v1545, 0.26601171
        %v1680 = vrot.slane %v1664, 5
        %v1681 = vrot.slane %v1665, 5
        %v1682 = vsel %vm570, %v1680, %v1681
        %v1683 = vrot.slane %v1666, 5
        %v1684 = vrot.slane %v1667, 5
        %v1685 = vsel %vm570, %v1683, %v1684
        %v1686 = vrot.slane %v1668, 5
        %v1687 = vrot.slane %v1669, 5
        %v1688 = vsel %vm570, %v1686, %v1687
        %v1689 = vrot.slane %v1670, 5
        %v1690 = vrot.slane %v1671, 5
        %v1691 = vsel %vm570, %v1689, %v1690
        %v1696 = vadd.f32 %v1660, %v1682
        %v1697 = vadd.f32 %v1661, %v1685
        %v1698 = vadd.f32 %v1662, %v1688
        %v1699 = vadd.f32 %v1663, %v1691
        %v1700 = vrot.slane %v1628, 6
        %v1701 = vrot.slane %v1629, 6
        %v1702 = vsel %vm591, %v1700, %v1701
        %v1703 = vrot.slane %v1630, 6
        %v1704 = vrot.slane %v1631, 6
        %v1705 = vsel %vm591, %v1703, %v1704
        %v1706 = vrot.slane %v1632, 6
        %v1707 = vrot.slane %v1633, 6
        %v1708 = vsel %vm591, %v1706, %v1707
        %v1709 = vrot.slane %v1634, 6
        %v1710 = vrot.slane %v1635, 6
        %v1711 = vsel %vm591, %v1709, %v1710
        %v1716 = vadd.f32 %v1696, %v1702
        %v1717 = vadd.f32 %v1697, %v1705
        %v1718 = vadd.f32 %v1698, %v1708
        %v1719 = vadd.f32 %v1699, %v1711
        %v1720 = vrot.slane %v1592, 7
        %v1721 = vrot.slane %v1593, 7
        %v1722 = vsel %vm612, %v1720, %v1721
        %v1723 = vrot.slane %v1594, 7
        %v1724 = vrot.slane %v1595, 7
        %v1725 = vsel %vm612, %v1723, %v1724
        %v1726 = vrot.slane %v1596, 7
        %v1727 = vrot.slane %v1597, 7
        %v1728 = vsel %vm612, %v1726, %v1727
        %v1729 = vrot.slane %v1598, 7
        %v1730 = vrot.slane %v1599, 7
        %v1731 = vsel %vm612, %v1729, %v1730
        %v1736 = vadd.f32 %v1716, %v1722
        %v1737 = vadd.f32 %v1717, %v1725
        %v1738 = vadd.f32 %v1718, %v1728
        %v1739 = vadd.f32 %v1719, %v1731
        %v1740 = vmul.f32 %v1515, 0.036000773
        %v1741 = vmul.f32 %v1525, 0.036000773
        %v1742 = vmul.f32 %v1535, 0.036000773
        %v1743 = vmul.f32 %v1545, 0.036000773
        %v1744 = vadd.f32 %v1736, %v1740
        %v1745 = vadd.f32 %v1737, %v1741
        %v1746 = vadd.f32 %v1738, %v1742
        %v1747 = vadd.f32 %v1739, %v1743
        %v1748 = vmul.f32 %v1515, 0.007598758
        %v1749 = vmul.f32 %v1525, 0.007598758
        %v1750 = vmul.f32 %v1535, 0.007598758
        %v1751 = vmul.f32 %v1545, 0.007598758
        %v1756 = vrot.slane %v1748, 1
        %v1757 = vrot.slane %v1749, 1
        %v1758 = vrot.slane %v1750, 1
        %v1759 = vrot.slane %v1751, 1
        %v1764 = vadd.f32 %v1744, %v1756
        %v1765 = vadd.f32 %v1745, %v1757
        %v1766 = vadd.f32 %v1746, %v1758
        %v1767 = vadd.f32 %v1747, %v1759
        %v1768 = vmul.f32 %v1515, 0.0010283801
        %v1769 = vmul.f32 %v1525, 0.0010283801
        %v1770 = vmul.f32 %v1535, 0.0010283801
        %v1771 = vmul.f32 %v1545, 0.0010283801
        %v1776 = vrot.slane %v1768, 2
        %v1777 = vrot.slane %v1769, 2
        %v1778 = vrot.slane %v1770, 2
        %v1779 = vrot.slane %v1771, 2
        %v1784 = vadd.f32 %v1764, %v1776
        %v1785 = vadd.f32 %v1765, %v1777
        %v1786 = vadd.f32 %v1766, %v1778
        %v1787 = vadd.f32 %v1767, %v1779
        %v1789 = vsel %vm306, %v298, 0
        %v1792 = vsel %vm306, %v299, 0
        %v1795 = vsel %vm306, %v300, 0
        %v1798 = vsel %vm306, %v301, 0
        %v1801 = vsel %vm306, %v302, 0
        %v1804 = vsel %vm306, %v303, 0
        %v1807 = vsel %vm306, %v304, 0
        %v1810 = vsel %vm306, %v305, 0
        %1812 = vmatprep.subr.mxu0 0.0
        %1813 = vmatpush1.msra.mxu0 0.0
        %1814 = vmatprep.subr.mxu0 0.0
        %1815 = vmatpush1.msra.mxu0 0.0
        %1816 = vmatprep.subr.mxu0 0.0
        %1817 = vmatpush1.msra.mxu0 0.0
        %1818 = vmatprep.subr.mxu0 0.0
        %1819 = vmatpush1.msra.mxu0 0.0
        %1820 = vmatprep.subr.mxu0 0.0
        %1821 = vmatpush1.msra.mxu0 0.0
        %1822 = vmatprep.subr.mxu0 0.0
        %1823 = vmatpush1.msra.mxu0 0.0
        %1824 = vmatprep.subr.mxu0 0.0
        %1825 = vmatpush1.msra.mxu0 0.0
        %1826 = vmatprep.subr.mxu0 0.0
        %1827 = vmatpush1.msra.mxu0 0.0
        %1828 = vmatprep.subr.mxu0 0.0
        %1829 = vmatpush1.msra.mxu0 0.0
        %1830 = vmatprep.subr.mxu0 0.0
        %1831 = vmatpush1.msra.mxu0 0.0
        %1832 = vmatprep.subr.mxu0 0.0
        %1833 = vmatpush1.msra.mxu0 0.0
        %1834 = vmatprep.subr.mxu0 0.0
        %1835 = vmatpush1.msra.mxu0 0.0
        %1836 = vmatprep.subr.mxu0 0.0
        %1837 = vmatpush1.msra.mxu0 0.0
        %1838 = vmatprep.subr.mxu0 0.0
        %1839 = vmatpush1.msra.mxu0 0.0
        %1840 = vmatprep.subr.mxu0 0.0
        %1841 = vmatpush1.msra.mxu0 %v281
        %1842 = vmatprep.subr.mxu0 0.0
        %1843 = vmatpush1.msra.mxu0 %v280
        %1844 = vmatprep.subr.mxu0 0.0
        %1845 = vmatpush2.msra.mxu0 0.0
        %1846 = vmatprep.subr.mxu0 0.0
        %1847 = vmatpush2.msra.mxu0 0.0
        %1848 = vmatprep.subr.mxu0 0.0
        %1849 = vmatpush2.msra.mxu0 0.0
        %1850 = vmatprep.subr.mxu0 0.0
        %1851 = vmatpush2.msra.mxu0 0.0
        %1852 = vmatprep.subr.mxu0 0.0
        %1853 = vmatpush2.msra.mxu0 0.0
        %1854 = vmatprep.subr.mxu0 0.0
        %1855 = vmatpush2.msra.mxu0 0.0
        %1856 = vmatprep.subr.mxu0 0.0
        %1857 = vmatpush2.msra.mxu0 0.0
        %1858 = vmatprep.subr.mxu0 0.0
        %1859 = vmatpush2.msra.mxu0 0.0
        %1860 = vmatprep.subr.mxu0 0.0
        %1861 = vmatpush2.msra.mxu0 0.0
        %1862 = vmatprep.subr.mxu0 0.0
        %1863 = vmatpush2.msra.mxu0 0.0
        %1864 = vmatprep.subr.mxu0 0.0
        %1865 = vmatpush2.msra.mxu0 0.0
        %1866 = vmatprep.subr.mxu0 0.0
        %1867 = vmatpush2.msra.mxu0 0.0
        %1868 = vmatprep.subr.mxu0 0.0
        %1869 = vmatpush2.msra.mxu0 0.0
        %1870 = vmatprep.subr.mxu0 0.0
        %1871 = vmatpush2.msra.mxu0 0.0
        %1872 = vmatprep.subr.mxu0 0.0
        %1873 = vmatpush2.msra.mxu0 0.0
        %1874 = vmatprep.subr.mxu0 0.0
        %1875 = vmatpush2.msra.mxu0 0.0
        %1876 = vmatprep.mubr.f32.mxu0 0.0
        %1877 = vmatmul.mubr.f32.gmra.mxu0 %v1789
        %v1878 = vpop.f32.mrf.mxu0
        %v1879 = vadd.f32 0.0, %v1878
        %v1880 = vpop.f32.mrf.mxu0
        %1881 = vmatprep.mubr.f32.mxu0 0.0
        %1882 = vmatmul.mubr.f32.gmra.mxu0 %v1792
        %v1883 = vpop.f32.mrf.mxu0
        %v1884 = vadd.f32 0.0, %v1883
        %v1885 = vpop.f32.mrf.mxu0
        %1886 = vmatprep.mubr.f32.mxu0 0.0
        %1887 = vmatmul.mubr.f32.gmra.mxu0 %v1795
        %v1888 = vpop.f32.mrf.mxu0
        %v1889 = vadd.f32 0.0, %v1888
        %v1890 = vpop.f32.mrf.mxu0
        %1891 = vmatprep.mubr.f32.mxu0 0.0
        %1892 = vmatmul.mubr.f32.gmra.mxu0 %v1798
        %v1893 = vpop.f32.mrf.mxu0
        %v1894 = vadd.f32 0.0, %v1893
        %v1895 = vpop.f32.mrf.mxu0
        %1896 = vmatprep.mubr.f32.mxu0 0.0
        %1897 = vmatmul.mubr.f32.gmra.mxu0 %v1801
        %v1898 = vpop.f32.mrf.mxu0
        %v1899 = vadd.f32 0.0, %v1898
        %v1900 = vpop.f32.mrf.mxu0
        %1901 = vmatprep.mubr.f32.mxu0 0.0
        %1902 = vmatmul.mubr.f32.gmra.mxu0 %v1804
        %v1903 = vpop.f32.mrf.mxu0
        %v1904 = vadd.f32 0.0, %v1903
        %v1905 = vpop.f32.mrf.mxu0
        %1906 = vmatprep.mubr.f32.mxu0 0.0
        %1907 = vmatmul.mubr.f32.gmra.mxu0 %v1807
        %v1908 = vpop.f32.mrf.mxu0
        %v1909 = vadd.f32 0.0, %v1908
        %v1910 = vpop.f32.mrf.mxu0
        %1911 = vmatprep.mubr.f32.mxu0 0.0
        %1912 = vmatmul.mubr.f32.gmra.mxu0 %v1810
        %v1913 = vpop.f32.mrf.mxu0
        %v1914 = vadd.f32 0.0, %v1913
        %v1915 = vpop.f32.mrf.mxu0
        %1916 = vdwg.mxu0
        %v1917 = vmul.f32 %v1879, 0.0010283801
        %v1918 = vmul.f32 %v1889, 0.0010283801
        %v1919 = vmul.f32 %v1899, 0.0010283801
        %v1920 = vmul.f32 %v1909, 0.0010283801
        %v1921 = vmul.f32 %v1879, 0.007598758
        %v1922 = vmul.f32 %v1889, 0.007598758
        %v1923 = vmul.f32 %v1899, 0.007598758
        %v1924 = vmul.f32 %v1909, 0.007598758
        %v1929 = vrot.slane %v1921, 1
        %v1930 = vrot.slane %v1922, 1
        %v1931 = vrot.slane %v1923, 1
        %v1932 = vrot.slane %v1924, 1
        %v1937 = vadd.f32 %v1917, %v1929
        %v1938 = vadd.f32 %v1918, %v1930
        %v1939 = vadd.f32 %v1919, %v1931
        %v1940 = vadd.f32 %v1920, %v1932
        %v1941 = vmul.f32 %v1879, 0.036000773
        %v1942 = vmul.f32 %v1889, 0.036000773
        %v1943 = vmul.f32 %v1899, 0.036000773
        %v1944 = vmul.f32 %v1909, 0.036000773
        %v1949 = vrot.slane %v1941, 2
        %v1950 = vrot.slane %v1942, 2
        %v1951 = vrot.slane %v1943, 2
        %v1952 = vrot.slane %v1944, 2
        %v1957 = vadd.f32 %v1937, %v1949
        %v1958 = vadd.f32 %v1938, %v1950
        %v1959 = vadd.f32 %v1939, %v1951
        %v1960 = vadd.f32 %v1940, %v1952
        %v1961 = vmul.f32 %v1879, 0.10936069
        %v1962 = vmul.f32 %v1884, 0.10936069
        %v1963 = vmul.f32 %v1889, 0.10936069
        %v1964 = vmul.f32 %v1894, 0.10936069
        %v1965 = vmul.f32 %v1899, 0.10936069
        %v1966 = vmul.f32 %v1904, 0.10936069
        %v1967 = vmul.f32 %v1909, 0.10936069
        %v1968 = vmul.f32 %v1914, 0.10936069
        %v1977 = vrot.slane %v1961, 3
        %v1978 = vrot.slane %v1962, 3
        %v1979 = vsel %vm496, %v1977, %v1978
        %v1980 = vrot.slane %v1963, 3
        %v1981 = vrot.slane %v1964, 3
        %v1982 = vsel %vm496, %v1980, %v1981
        %v1983 = vrot.slane %v1965, 3
        %v1984 = vrot.slane %v1966, 3
        %v1985 = vsel %vm496, %v1983, %v1984
        %v1986 = vrot.slane %v1967, 3
        %v1987 = vrot.slane %v1968, 3
        %v1988 = vsel %vm496, %v1986, %v1987
        %v1993 = vadd.f32 %v1957, %v1979
        %v1994 = vadd.f32 %v1958, %v1982
        %v1995 = vadd.f32 %v1959, %v1985
        %v1996 = vadd.f32 %v1960, %v1988
        %v1997 = vmul.f32 %v1879, 0.21300554
        %v1998 = vmul.f32 %v1884, 0.21300554
        %v1999 = vmul.f32 %v1889, 0.21300554
        %v2000 = vmul.f32 %v1894, 0.21300554
        %v2001 = vmul.f32 %v1899, 0.21300554
        %v2002 = vmul.f32 %v1904, 0.21300554
        %v2003 = vmul.f32 %v1909, 0.21300554
        %v2004 = vmul.f32 %v1914, 0.21300554
        %v2013 = vrot.slane %v1997, 4
        %v2014 = vrot.slane %v1998, 4
        %v2015 = vsel %vm533, %v2013, %v2014
        %v2016 = vrot.slane %v1999, 4
        %v2017 = vrot.slane %v2000, 4
        %v2018 = vsel %vm533, %v2016, %v2017
        %v2019 = vrot.slane %v2001, 4
        %v2020 = vrot.slane %v2002, 4
        %v2021 = vsel %vm533, %v2019, %v2020
        %v2022 = vrot.slane %v2003, 4
        %v2023 = vrot.slane %v2004, 4
        %v2024 = vsel %vm533, %v2022, %v2023
        %v2029 = vadd.f32 %v1993, %v2015
        %v2030 = vadd.f32 %v1994, %v2018
        %v2031 = vadd.f32 %v1995, %v2021
        %v2032 = vadd.f32 %v1996, %v2024
        %v2033 = vmul.f32 %v1879, 0.26601171
        %v2034 = vmul.f32 %v1884, 0.26601171
        %v2035 = vmul.f32 %v1889, 0.26601171
        %v2036 = vmul.f32 %v1894, 0.26601171
        %v2037 = vmul.f32 %v1899, 0.26601171
        %v2038 = vmul.f32 %v1904, 0.26601171
        %v2039 = vmul.f32 %v1909, 0.26601171
        %v2040 = vmul.f32 %v1914, 0.26601171
        %v2049 = vrot.slane %v2033, 5
        %v2050 = vrot.slane %v2034, 5
        %v2051 = vsel %vm570, %v2049, %v2050
        %v2052 = vrot.slane %v2035, 5
        %v2053 = vrot.slane %v2036, 5
        %v2054 = vsel %vm570, %v2052, %v2053
        %v2055 = vrot.slane %v2037, 5
        %v2056 = vrot.slane %v2038, 5
        %v2057 = vsel %vm570, %v2055, %v2056
        %v2058 = vrot.slane %v2039, 5
        %v2059 = vrot.slane %v2040, 5
        %v2060 = vsel %vm570, %v2058, %v2059
        %v2065 = vadd.f32 %v2029, %v2051
        %v2066 = vadd.f32 %v2030, %v2054
        %v2067 = vadd.f32 %v2031, %v2057
        %v2068 = vadd.f32 %v2032, %v2060
        %v2069 = vrot.slane %v1997, 6
        %v2070 = vrot.slane %v1998, 6
        %v2071 = vsel %vm591, %v2069, %v2070
        %v2072 = vrot.slane %v1999, 6
        %v2073 = vrot.slane %v2000, 6
        %v2074 = vsel %vm591, %v2072, %v2073
        %v2075 = vrot.slane %v2001, 6
        %v2076 = vrot.slane %v2002, 6
        %v2077 = vsel %vm591, %v2075, %v2076
        %v2078 = vrot.slane %v2003, 6
        %v2079 = vrot.slane %v2004, 6
        %v2080 = vsel %vm591, %v2078, %v2079
        %v2085 = vadd.f32 %v2065, %v2071
        %v2086 = vadd.f32 %v2066, %v2074
        %v2087 = vadd.f32 %v2067, %v2077
        %v2088 = vadd.f32 %v2068, %v2080
        %v2089 = vrot.slane %v1961, 7
        %v2090 = vrot.slane %v1962, 7
        %v2091 = vsel %vm612, %v2089, %v2090
        %v2092 = vrot.slane %v1963, 7
        %v2093 = vrot.slane %v1964, 7
        %v2094 = vsel %vm612, %v2092, %v2093
        %v2095 = vrot.slane %v1965, 7
        %v2096 = vrot.slane %v1966, 7
        %v2097 = vsel %vm612, %v2095, %v2096
        %v2098 = vrot.slane %v1967, 7
        %v2099 = vrot.slane %v1968, 7
        %v2100 = vsel %vm612, %v2098, %v2099
        %v2105 = vadd.f32 %v2085, %v2091
        %v2106 = vadd.f32 %v2086, %v2094
        %v2107 = vadd.f32 %v2087, %v2097
        %v2108 = vadd.f32 %v2088, %v2100
        %v2109 = vmul.f32 %v1884, 0.036000773
        %v2110 = vmul.f32 %v1894, 0.036000773
        %v2111 = vmul.f32 %v1904, 0.036000773
        %v2112 = vmul.f32 %v1914, 0.036000773
        %v2113 = vadd.f32 %v2105, %v2109
        %v2114 = vadd.f32 %v2106, %v2110
        %v2115 = vadd.f32 %v2107, %v2111
        %v2116 = vadd.f32 %v2108, %v2112
        %v2117 = vmul.f32 %v1884, 0.007598758
        %v2118 = vmul.f32 %v1894, 0.007598758
        %v2119 = vmul.f32 %v1904, 0.007598758
        %v2120 = vmul.f32 %v1914, 0.007598758
        %v2125 = vrot.slane %v2117, 1
        %v2126 = vrot.slane %v2118, 1
        %v2127 = vrot.slane %v2119, 1
        %v2128 = vrot.slane %v2120, 1
        %v2133 = vadd.f32 %v2113, %v2125
        %v2134 = vadd.f32 %v2114, %v2126
        %v2135 = vadd.f32 %v2115, %v2127
        %v2136 = vadd.f32 %v2116, %v2128
        %v2137 = vmul.f32 %v1884, 0.0010283801
        %v2138 = vmul.f32 %v1894, 0.0010283801
        %v2139 = vmul.f32 %v1904, 0.0010283801
        %v2140 = vmul.f32 %v1914, 0.0010283801
        %v2145 = vrot.slane %v2137, 2
        %v2146 = vrot.slane %v2138, 2
        %v2147 = vrot.slane %v2139, 2
        %v2148 = vrot.slane %v2140, 2
        %v2153 = vadd.f32 %v2133, %v2145
        %v2154 = vadd.f32 %v2134, %v2146
        %v2155 = vadd.f32 %v2135, %v2147
        %v2156 = vadd.f32 %v2136, %v2148
        %v2157 = vmul.f32 %v677, %v677
        %v2158 = vmul.f32 %v678, %v678
        %v2159 = vmul.f32 %v679, %v679
        %v2160 = vmul.f32 %v680, %v680
        %v2161 = vmul.f32 %v1046, %v1046
        %v2162 = vmul.f32 %v1047, %v1047
        %v2163 = vmul.f32 %v1048, %v1048
        %v2164 = vmul.f32 %v1049, %v1049
        %v2165 = vmul.f32 %v677, %v1046
        %v2166 = vmul.f32 %v678, %v1047
        %v2167 = vmul.f32 %v679, %v1048
        %v2168 = vmul.f32 %v680, %v1049
        %v2169 = vsub.f32 %v1415, %v2157
        %v2170 = vsub.f32 %v1416, %v2158
        %v2171 = vsub.f32 %v1417, %v2159
        %v2172 = vsub.f32 %v1418, %v2160
        %v2173 = vsub.f32 %v1784, %v2161
        %v2174 = vsub.f32 %v1785, %v2162
        %v2175 = vsub.f32 %v1786, %v2163
        %v2176 = vsub.f32 %v1787, %v2164
        %v2177 = vsub.f32 %v2153, %v2165
        %v2178 = vsub.f32 %v2154, %v2166
        %v2179 = vsub.f32 %v2155, %v2167
        %v2180 = vsub.f32 %v2156, %v2168
        %v2181 = vmul.f32 %v2177, 2.0
        %v2182 = vmul.f32 %v2178, 2.0
        %v2183 = vmul.f32 %v2179, 2.0
        %v2184 = vmul.f32 %v2180, 2.0
        %v2185 = vstv %s263
        %v2186 = vadd.f32 %v2181, %v2185
        %v2187 = vadd.f32 %v2182, %v2185
        %v2188 = vadd.f32 %v2183, %v2185
        %v2189 = vadd.f32 %v2184, %v2185
        %v2190 = vadd.f32 %v2169, %v2173
        %v2191 = vadd.f32 %v2170, %v2174
        %v2192 = vadd.f32 %v2171, %v2175
        %v2193 = vadd.f32 %v2172, %v2176
        %v2194 = vadd.f32 %v2190, %v2185
        %v2195 = vadd.f32 %v2191, %v2185
        %v2196 = vadd.f32 %v2192, %v2185
        %v2197 = vadd.f32 %v2193, %v2185
        %v2198 = vmul.f32 %v2165, 2.0
        %v2199 = vmul.f32 %v2166, 2.0
        %v2200 = vmul.f32 %v2167, 2.0
        %v2201 = vmul.f32 %v2168, 2.0
        %v2202 = vstv %s262
        %v2203 = vadd.f32 %v2198, %v2202
        %v2204 = vadd.f32 %v2199, %v2202
        %v2205 = vadd.f32 %v2200, %v2202
        %v2206 = vadd.f32 %v2201, %v2202
        %v2207 = vmul.f32 %v2203, %v2186
        %v2208 = vmul.f32 %v2204, %v2187
        %v2209 = vmul.f32 %v2205, %v2188
        %v2210 = vmul.f32 %v2206, %v2189
        %v2211 = vadd.f32 %v2157, %v2161
        %v2212 = vadd.f32 %v2158, %v2162
        %v2213 = vadd.f32 %v2159, %v2163
        %v2214 = vadd.f32 %v2160, %v2164
        %v2215 = vadd.f32 %v2211, %v2202
        %v2216 = vadd.f32 %v2212, %v2202
        %v2217 = vadd.f32 %v2213, %v2202
        %v2218 = vadd.f32 %v2214, %v2202
        %v2219 = vmul.f32 %v2215, %v2194
        %v2220 = vmul.f32 %v2216, %v2195
        %v2221 = vmul.f32 %v2217, %v2196
        %v2222 = vmul.f32 %v2218, %v2197
        %v2223 = vrcp.pop %v2219
        %v2224 = vrcp.pop %v2220
        %v2225 = vrcp.pop %v2221
        %v2226 = vrcp.pop %v2222
        %v2227 = vmul.f32 %v2207, %v2223
        %v2228 = vmul.f32 %v2208, %v2224
        %v2229 = vmul.f32 %v2209, %v2225
        %v2230 = vmul.f32 %v2210, %v2226
        %vm2231 = vcmask 46080
        %v2232 = vsel %vm2231, %v2227, 0.0
        %v2233 = vsel %vm2231, %v2228, 0.0
        %v2234 = vadd.f32 %v2232, %v2233
        %v2235 = vsel %vm2231, %v2229, 0.0
        %v2236 = vadd.f32 %v2234, %v2235
        %v2237 = vsel %vm2231, %v2230, 0.0
        %v2238 = vadd.f32 %v2236, %v2237
        %2239 = vadd.xlane.f32.xlu0 %v2238
        %v2240 = vpop.xlane.xlu0 %2239
        %v2241 = vrot.slane %v2240, 4
        %v2242 = vadd.f32 %v2240, %v2241
        %v2243 = vrot.slane %v2242, 2
        %v2244 = vadd.f32 %v2242, %v2243
        %v2245 = vrot.slane %v2244, 1
        %v2246 = vadd.f32 %v2244, %v2245
        %s2247 = vtos %v2246
        %s2248 = smul.f32 %s2247, 0.0034722222
        %p2249 = scmp.eq.s32.totalorder %s23, 0
        // Predicated region
        $region49: #{tpu_custom_call.1} parent=35 // pred_check
          %p2250 = pneg %p2249
        $region50: #{tpu_custom_call.1} parent=35 // pred_check_branch
          %2252 = sbr.rel (%p2250) target = $region52
        $region51: #{tpu_custom_call.1} parent=35 // pred_region
          %vm2253 = vcmask 0
          %2254 = vst.msk [vmem:[#allocation9] sm:$0x1] %vm2253, 0.0
        $region52: #{tpu_custom_call.1} parent=35 // pred_fallthru
          _
        %v2255 = vld [vmem:[#allocation9] sm:$0x1]
        %v2256 = vstv %s2248
        %v2257 = vadd.f32 %v2255, %v2256
        %vm2258 = vcmask 0
        %2259 = vst.msk [vmem:[#allocation9] sm:$0x1] %vm2258, %v2257
        // Predicated region
        $region53: #{tpu_custom_call.1} parent=35 // pred_check
          %p2260 = pneg %p130
        $region54: #{tpu_custom_call.1} parent=35 // pred_check_branch
          %2262 = sbr.rel (%p2260) target = $region56
        $region55: #{tpu_custom_call.1} parent=35 // pred_region
          %s2264 = ssub.s32 16, 16
          %2265 = vsyncadd [#allocation4], %s2264
          %s2267 = sshll.u32 [#allocation9], 4
          %s2268 = int_to_ptr.vmem [resolvable:$true] %s2267
          %2270 = dma.vmem_to_hbm [thread:$0]  %s2268, 16, %s4, [#allocation4]
        $region56: #{tpu_custom_call.1} parent=35 // pred_fallthru
          _
        // Predicated region
        $region57: #{tpu_custom_call.1} parent=35 // pred_check
          %p2271 = pneg %p130
        $region58: #{tpu_custom_call.1} parent=35 // pred_check_branch
          %2273 = sbr.rel (%p2271) target = $region60
        $region59: #{tpu_custom_call.1} parent=35 // pred_region
          %2274 = dma.done [#allocation4], 16
        $region60: #{tpu_custom_call.1} parent=35 // pred_fallthru
          _
      $region36: #{tpu_custom_call.1} parent=5 // pred_fallthru
        _
      %p2275 = scmp.le.s32.totalorder 2, %s18
      // Predicated region
      $region61: #{tpu_custom_call.1} parent=5 // pred_check
        %p2276 = pneg %p2275
      $region62: #{tpu_custom_call.1} parent=5 // pred_check_branch
        %2278 = sbr.rel (%p2276) target = $region64
      $region63: #{tpu_custom_call.1} parent=5 // pred_region
        %s2279 = ssub.s32 %s18, 2
      $region64: #{tpu_custom_call.1} parent=5 // pred_fallthru
        _
    $region6: #{tpu_custom_call.1} parent=1 // loop_footer
      %s22 = sadd.s32 1, %s18
    $region7: #{tpu_custom_call.1} parent=1 // loop_footer_branch
      %17 = sbr.rel target = $region3
    $region8: #{tpu_custom_call.1} parent=1 // loop_exit
      _
    %2280 = vsyncpa [#allocation3], 1
    %s2281 = scalar_lea.sflag [#allocation3], 1
    %2282 = vsyncpa %s2281, 1
    %2283 = vsyncpa [#allocation8], 1
    %s2284 = scalar_lea.sflag [#allocation8], 1
    %2285 = vsyncpa %s2284, 1
    %2286 = vsyncpa [#allocation4], 1
    %s2287 = scalar_lea.sflag [#allocation4], 1
    %2288 = vsyncpa %s2287, 1
    %2289 = vsyncpa [#allocation5], 1
    %s2290 = scalar_lea.sflag [#allocation5], 1
    %2291 = vsyncpa %s2290, 1

</llo_original>
